<compile_context>
chip_gen: v7x
topology: tpu7x:2x2x1
jax: 0.10.0
libtpu: 0.0.40
codegen_flags: <defaults>
</compile_context>

<pallas_src>
import numpy as np
import jax
import jax.numpy as jnp
from jax.experimental import pallas as pl
from jax.experimental.pallas import tpu as pltpu

_LANE = 128   # lane width: Cin/Cout padded to multiples of this
_TH = 8       # output rows computed per inner tile (bounds the f32 accumulator)


# ----------------------------- Pallas kernel -------------------------------
def dualconv_kernel(x_ref, w_ref, b_ref, o_ref):
    # x_ref : (Hp, Wpp, Cp)     bf16, zero-padded slab, Hp = Hpo + 2
    # w_ref : (9, Cp, Coutp)    bf16 folded 3x3 weight, tap-major (ky*3+kx)
    # b_ref : (1, Coutp)        f32 folded bias
    # o_ref : (Hpo, Wpp, Coutp) f32 (wrapper slices [:H, :W, :Cout])
    Hpo, Wpp, Coutp = o_ref.shape
    Cp = x_ref.shape[-1]
    n_tiles = Hpo // _TH
    rows = _TH * Wpp

    bias = b_ref[...]                                  # (1, Coutp), hoisted

    def tile_body(t, carry):
        h0 = pl.multiple_of(t * _TH, _TH)
        acc = jnp.zeros((rows, Coutp), jnp.float32)
        for ky in range(3):                            # static unroll: 9 taps
            # leading-dim slice only (cheap); layout-free reshape
            xs = x_ref[pl.ds(h0 + ky, _TH), :, :].reshape(rows, Cp)
            for kx in range(3):
                y = jnp.dot(xs, w_ref[3 * ky + kx],
                            preferred_element_type=jnp.float32)
                if kx:
                    # column shift by kx done as an XLU sublane rotate on the
                    # flat rows axis; wrapped rows only touch padded columns.
                    y = pltpu.roll(y, shift=rows - kx, axis=0)
                acc = acc + y
        out = jnp.maximum(acc + bias, 0.0)             # fused bias + ReLU
        o_ref[pl.ds(h0, _TH), :, :] = (
            out.reshape(_TH, Wpp, Coutp).astype(o_ref.dtype))
        return carry

    jax.lax.fori_loop(0, n_tiles, tile_body, 0)


# --------------------------- parameter folding -----------------------------
def _expand_grouped(gc_w, g, cin):
    """(Cout, Cin//g, 3, 3) grouped weight -> dense (Cout, Cin, 3, 3)."""
    cout, cin_g, kh, kw = gc_w.shape
    out_g = cout // g
    dense = jnp.zeros((cout, cin, kh, kw), gc_w.dtype)
    for gi in range(g):
        dense = dense.at[gi * out_g:(gi + 1) * out_g,
                         gi * cin_g:(gi + 1) * cin_g].set(
            gc_w[gi * out_g:(gi + 1) * out_g])
    return dense


def _bn_affine(gamma, beta, mean, var, eps):
    a = gamma / jnp.sqrt(var + eps)
    b = beta - a * mean
    return a, b


def _round_up(x, m):
    return (x + m - 1) // m * m


def dualconv2_forward(x_nchw, gc_w, pwc_w, bn_gc, bn_pwc, *, g=2, eps=1e-5):
    """Forward pass of DualConv2 (stride=1). x_nchw: (B, Cin, H, W)."""
    B, Cin, H, W = x_nchw.shape
    Cout = gc_w.shape[0]

    # ---- fold BN + 1x1 into one dense 3x3 weight + bias (all in f32) ----
    a1, b1 = _bn_affine(*bn_gc, eps)
    a2, b2 = _bn_affine(*bn_pwc, eps)
    w_dense = _expand_grouped(gc_w, g, Cin) * a1[:, None, None, None]
    w_dense = w_dense.at[:, :, 1, 1].add(a2[:, None] * pwc_w[:, :, 0, 0])
    bias = (b1 + b2).astype(jnp.float32)

    # ---- lane-dense channel padding; weights to bf16 AFTER folding ----
    Cp = _round_up(Cin, _LANE)
    Coutp = _round_up(Cout, _LANE)
    w_k = jnp.transpose(w_dense, (2, 3, 1, 0)).reshape(9, Cin, Cout)
    w_k = jnp.pad(w_k, ((0, 0), (0, Cp - Cin),
                        (0, Coutp - Cout))).astype(jnp.bfloat16)
    bias_p = jnp.pad(bias, (0, Coutp - Cout)).reshape(1, Coutp)  # stays f32

    # ---- activation slab: NHWC, bf16, one fused pad for conv halo +
    #      sublane-aligned width + lane-padded channels + TH-aligned height ----
    Hpo = _round_up(H, _TH)            # padded output rows (multiple of _TH)
    Wpp = _round_up(W + 2, 8)          # padded width, multiple of 8 sublanes
    x_nhwc = jnp.transpose(x_nchw, (0, 2, 3, 1)).astype(jnp.bfloat16)
    x_pad = jnp.pad(
        x_nhwc,
        ((0, 0), (1, 1 + (Hpo - H)), (1, Wpp - W - 1), (0, Cp - Cin)))
    Hp = Hpo + 2

    out = pl.pallas_call(
        dualconv_kernel,
        out_shape=jax.ShapeDtypeStruct((B, Hpo, Wpp, Coutp), jnp.float32),
        grid=(B,),
        in_specs=[
            pl.BlockSpec((None, Hp, Wpp, Cp), lambda b: (b, 0, 0, 0)),
            pl.BlockSpec((9, Cp, Coutp), lambda b: (0, 0, 0)),
            pl.BlockSpec((1, Coutp), lambda b: (0, 0)),
        ],
        out_specs=pl.BlockSpec((None, Hpo, Wpp, Coutp),
                               lambda b: (b, 0, 0, 0)),
        compiler_params=pltpu.CompilerParams(
            dimension_semantics=("parallel",),
            vmem_limit_bytes=32 * 1024 * 1024),
    )(x_pad, w_k, bias_p)

    # Strip padding and return NCHW like the PyTorch module (fuses into one
    # XLA slice+transpose).
    return jnp.transpose(out[:, :H, :W, :Cout], (0, 3, 1, 2))


# ------------------------------ reference ----------------------------------
def reference_forward(x, gc_w, pwc_w, bn_gc, bn_pwc, *, g=2, eps=1e-5):
    gc_out = jax.lax.conv_general_dilated(
        x, gc_w, (1, 1), ((1, 1), (1, 1)),
        dimension_numbers=("NCHW", "OIHW", "NCHW"), feature_group_count=g)
    pwc_out = jax.lax.conv_general_dilated(
        x, pwc_w, (1, 1), ((0, 0), (0, 0)),
        dimension_numbers=("NCHW", "OIHW", "NCHW"))

    def bn(y, p):
        gamma, beta, mean, var = p
        return (gamma[None, :, None, None]
                * (y - mean[None, :, None, None])
                / jnp.sqrt(var[None, :, None, None] + eps)
                + beta[None, :, None, None])

    return jnp.maximum(bn(gc_out, bn_gc) + bn(pwc_out, bn_pwc), 0.0)


# -------------------------------- driver -----------------------------------
if __name__ == "__main__":
    B, Cin, Cout, H, W, g = 2, 4, 8, 16, 16, 2

    key = jax.random.PRNGKey(0)
    k = jax.random.split(key, 11)

    x = jax.random.normal(k[0], (B, Cin, H, W), jnp.float32)

    # Deterministic parameter init (shapes follow nn.Conv2d / nn.BatchNorm2d).
    gc_w = 0.2 * jax.random.normal(k[1], (Cout, Cin // g, 3, 3), jnp.float32)
    pwc_w = 0.2 * jax.random.normal(k[2], (Cout, Cin, 1, 1), jnp.float32)
    bn_gc = (1.0 + 0.1 * jax.random.normal(k[3], (Cout,), jnp.float32),   # gamma
             0.1 * jax.random.normal(k[4], (Cout,), jnp.float32),         # beta
             0.1 * jax.random.normal(k[5], (Cout,), jnp.float32),         # running_mean
             1.0 + 0.1 * jax.nn.softplus(
                 jax.random.normal(k[6], (Cout,), jnp.float32)))          # running_var
    bn_pwc = (1.0 + 0.1 * jax.random.normal(k[7], (Cout,), jnp.float32),
              0.1 * jax.random.normal(k[8], (Cout,), jnp.float32),
              0.1 * jax.random.normal(k[9], (Cout,), jnp.float32),
              1.0 + 0.1 * jax.nn.softplus(
                  jax.random.normal(k[10], (Cout,), jnp.float32)))

    out = dualconv2_forward(x, gc_w, pwc_w, bn_gc, bn_pwc, g=g)
    out = jax.block_until_ready(out)

    ref = reference_forward(x, gc_w, pwc_w, bn_gc, bn_pwc, g=g)
    ref = jax.block_until_ready(ref)

    assert out.shape == (B, Cout, H, W), out.shape
    # bf16 activations/weights in the kernel (f32 accumulation) => compare
    # against the f32 reference with bf16-appropriate tolerance.
    np.testing.assert_allclose(np.asarray(out), np.asarray(ref),
                               rtol=5e-2, atol=5e-2)
    print("KERNEL_OK")
</pallas_src>

<mosaic_0001>
module attributes {stable_mosaic.version = 11 : i64} {
  func.func @dualconv_kernel(%arg0: i32, %arg1: memref<1x18x24x128xbf16, #tpu.memory_space<vmem>>, %arg2: memref<9x128x128xbf16, #tpu.memory_space<vmem>>, %arg3: memref<1x128xf32, #tpu.memory_space<vmem>>, %arg4: memref<1x16x24x128xf32, #tpu.memory_space<vmem>>) attributes {dimension_semantics = [#tpu.dimension_semantics<parallel>], iteration_bounds = array<i64: 2>, scalar_prefetch = 0 : i64, scratch_operands = 0 : i64, tpu.core_type = #tpu.core_type<tc>, window_params = [{transform_indices = @transform_0, window_bounds = array<i64: 1, 18, 24, 128>}, {pipeline_mode = #tpu.pipeline_mode<synchronous>, transform_indices = @transform_1, window_bounds = array<i64: 9, 128, 128>}, {pipeline_mode = #tpu.pipeline_mode<synchronous>, transform_indices = @transform_2, window_bounds = array<i64: 1, 128>}, {transform_indices = @transform_3, window_bounds = array<i64: 1, 16, 24, 128>}]} {
    %c0 = arith.constant 0 : index
    %c0_0 = arith.constant 0 : index
    %0 = vector.load %arg3[%c0, %c0_0] : memref<1x128xf32, #tpu.memory_space<vmem>>, vector<1x128xf32>
    %c0_i32 = arith.constant 0 : i32
    %c2_i32 = arith.constant 2 : i32
    %1 = arith.addi %c0_i32, %c2_i32 : i32
    %c1_i32 = arith.constant 1 : i32
    scf.for %arg5 = %c0_i32 to %1 step %c1_i32  : i32 {
      %c8_i32 = arith.constant 8 : i32
      %2 = arith.muli %arg5, %c8_i32 : i32
      %3 = tpu.assume_multiple %2, 8 : i32
      %cst = arith.constant 0.000000e+00 : f32
      %4 = vector.broadcast %cst : f32 to vector<192x128xf32>
      %c0_i32_2 = arith.constant 0 : i32
      %5 = arith.addi %3, %c0_i32_2 : i32
      %c0_3 = arith.constant 0 : index
      %6 = arith.index_cast %5 : i32 to index
      %c0_4 = arith.constant 0 : index
      %c0_5 = arith.constant 0 : index
      %7 = vector.load %arg1[%c0_3, %6, %c0_4, %c0_5] : memref<1x18x24x128xbf16, #tpu.memory_space<vmem>>, vector<1x8x24x128xbf16>
      %8 = vector.shape_cast %7 : vector<1x8x24x128xbf16> to vector<8x24x128xbf16>
      %9 = vector.shape_cast %8 : vector<8x24x128xbf16> to vector<192x128xbf16>
      %c0_6 = arith.constant 0 : index
      %c0_7 = arith.constant 0 : index
      %c0_8 = arith.constant 0 : index
      %10 = vector.load %arg2[%c0_6, %c0_7, %c0_8] : memref<9x128x128xbf16, #tpu.memory_space<vmem>>, vector<1x128x128xbf16>
      %11 = vector.shape_cast %10 : vector<1x128x128xbf16> to vector<128x128xbf16>
      %cst_9 = arith.constant dense<0.000000e+00> : vector<192x128xf32>
      %12 = tpu.matmul %9, %11, %cst_9 {dimension_numbers = #tpu.dot_dimension_numbers<[1], [0], [0], [1], [0, 0, 1, 1], [], []>} : vector<192x128xbf16>, vector<128x128xbf16>, vector<192x128xf32> -> vector<192x128xf32>
      %13 = arith.addf %4, %12 : vector<192x128xf32>
      %c1 = arith.constant 1 : index
      %c0_10 = arith.constant 0 : index
      %c0_11 = arith.constant 0 : index
      %14 = vector.load %arg2[%c1, %c0_10, %c0_11] : memref<9x128x128xbf16, #tpu.memory_space<vmem>>, vector<1x128x128xbf16>
      %15 = vector.shape_cast %14 : vector<1x128x128xbf16> to vector<128x128xbf16>
      %cst_12 = arith.constant dense<0.000000e+00> : vector<192x128xf32>
      %16 = tpu.matmul %9, %15, %cst_12 {dimension_numbers = #tpu.dot_dimension_numbers<[1], [0], [0], [1], [0, 0, 1, 1], [], []>} : vector<192x128xbf16>, vector<128x128xbf16>, vector<192x128xf32> -> vector<192x128xf32>
      %c191_i32 = arith.constant 191 : i32
      %17 = tpu.dynamic_rotate %16 by %c191_i32 dim 0 : vector<192x128xf32>, i32 -> vector<192x128xf32>
      %18 = arith.addf %13, %17 : vector<192x128xf32>
      %c2 = arith.constant 2 : index
      %c0_13 = arith.constant 0 : index
      %c0_14 = arith.constant 0 : index
      %19 = vector.load %arg2[%c2, %c0_13, %c0_14] : memref<9x128x128xbf16, #tpu.memory_space<vmem>>, vector<1x128x128xbf16>
      %20 = vector.shape_cast %19 : vector<1x128x128xbf16> to vector<128x128xbf16>
      %cst_15 = arith.constant dense<0.000000e+00> : vector<192x128xf32>
      %21 = tpu.matmul %9, %20, %cst_15 {dimension_numbers = #tpu.dot_dimension_numbers<[1], [0], [0], [1], [0, 0, 1, 1], [], []>} : vector<192x128xbf16>, vector<128x128xbf16>, vector<192x128xf32> -> vector<192x128xf32>
      %c190_i32 = arith.constant 190 : i32
      %22 = tpu.dynamic_rotate %21 by %c190_i32 dim 0 : vector<192x128xf32>, i32 -> vector<192x128xf32>
      %23 = arith.addf %18, %22 : vector<192x128xf32>
      %c1_i32_16 = arith.constant 1 : i32
      %24 = arith.addi %3, %c1_i32_16 : i32
      %c0_17 = arith.constant 0 : index
      %25 = arith.index_cast %24 : i32 to index
      %c0_18 = arith.constant 0 : index
      %c0_19 = arith.constant 0 : index
      %26 = vector.load %arg1[%c0_17, %25, %c0_18, %c0_19] : memref<1x18x24x128xbf16, #tpu.memory_space<vmem>>, vector<1x8x24x128xbf16>
      %27 = vector.shape_cast %26 : vector<1x8x24x128xbf16> to vector<8x24x128xbf16>
      %28 = vector.shape_cast %27 : vector<8x24x128xbf16> to vector<192x128xbf16>
      %c3 = arith.constant 3 : index
      %c0_20 = arith.constant 0 : index
      %c0_21 = arith.constant 0 : index
      %29 = vector.load %arg2[%c3, %c0_20, %c0_21] : memref<9x128x128xbf16, #tpu.memory_space<vmem>>, vector<1x128x128xbf16>
      %30 = vector.shape_cast %29 : vector<1x128x128xbf16> to vector<128x128xbf16>
      %cst_22 = arith.constant dense<0.000000e+00> : vector<192x128xf32>
      %31 = tpu.matmul %28, %30, %cst_22 {dimension_numbers = #tpu.dot_dimension_numbers<[1], [0], [0], [1], [0, 0, 1, 1], [], []>} : vector<192x128xbf16>, vector<128x128xbf16>, vector<192x128xf32> -> vector<192x128xf32>
      %32 = arith.addf %23, %31 : vector<192x128xf32>
      %c4 = arith.constant 4 : index
      %c0_23 = arith.constant 0 : index
      %c0_24 = arith.constant 0 : index
      %33 = vector.load %arg2[%c4, %c0_23, %c0_24] : memref<9x128x128xbf16, #tpu.memory_space<vmem>>, vector<1x128x128xbf16>
      %34 = vector.shape_cast %33 : vector<1x128x128xbf16> to vector<128x128xbf16>
      %cst_25 = arith.constant dense<0.000000e+00> : vector<192x128xf32>
      %35 = tpu.matmul %28, %34, %cst_25 {dimension_numbers = #tpu.dot_dimension_numbers<[1], [0], [0], [1], [0, 0, 1, 1], [], []>} : vector<192x128xbf16>, vector<128x128xbf16>, vector<192x128xf32> -> vector<192x128xf32>
      %c191_i32_26 = arith.constant 191 : i32
      %36 = tpu.dynamic_rotate %35 by %c191_i32_26 dim 0 : vector<192x128xf32>, i32 -> vector<192x128xf32>
      %37 = arith.addf %32, %36 : vector<192x128xf32>
      %c5 = arith.constant 5 : index
      %c0_27 = arith.constant 0 : index
      %c0_28 = arith.constant 0 : index
      %38 = vector.load %arg2[%c5, %c0_27, %c0_28] : memref<9x128x128xbf16, #tpu.memory_space<vmem>>, vector<1x128x128xbf16>
      %39 = vector.shape_cast %38 : vector<1x128x128xbf16> to vector<128x128xbf16>
      %cst_29 = arith.constant dense<0.000000e+00> : vector<192x128xf32>
      %40 = tpu.matmul %28, %39, %cst_29 {dimension_numbers = #tpu.dot_dimension_numbers<[1], [0], [0], [1], [0, 0, 1, 1], [], []>} : vector<192x128xbf16>, vector<128x128xbf16>, vector<192x128xf32> -> vector<192x128xf32>
      %c190_i32_30 = arith.constant 190 : i32
      %41 = tpu.dynamic_rotate %40 by %c190_i32_30 dim 0 : vector<192x128xf32>, i32 -> vector<192x128xf32>
      %42 = arith.addf %37, %41 : vector<192x128xf32>
      %c2_i32_31 = arith.constant 2 : i32
      %43 = arith.addi %3, %c2_i32_31 : i32
      %c0_32 = arith.constant 0 : index
      %44 = arith.index_cast %43 : i32 to index
      %c0_33 = arith.constant 0 : index
      %c0_34 = arith.constant 0 : index
      %45 = vector.load %arg1[%c0_32, %44, %c0_33, %c0_34] : memref<1x18x24x128xbf16, #tpu.memory_space<vmem>>, vector<1x8x24x128xbf16>
      %46 = vector.shape_cast %45 : vector<1x8x24x128xbf16> to vector<8x24x128xbf16>
      %47 = vector.shape_cast %46 : vector<8x24x128xbf16> to vector<192x128xbf16>
      %c6 = arith.constant 6 : index
      %c0_35 = arith.constant 0 : index
      %c0_36 = arith.constant 0 : index
      %48 = vector.load %arg2[%c6, %c0_35, %c0_36] : memref<9x128x128xbf16, #tpu.memory_space<vmem>>, vector<1x128x128xbf16>
      %49 = vector.shape_cast %48 : vector<1x128x128xbf16> to vector<128x128xbf16>
      %cst_37 = arith.constant dense<0.000000e+00> : vector<192x128xf32>
      %50 = tpu.matmul %47, %49, %cst_37 {dimension_numbers = #tpu.dot_dimension_numbers<[1], [0], [0], [1], [0, 0, 1, 1], [], []>} : vector<192x128xbf16>, vector<128x128xbf16>, vector<192x128xf32> -> vector<192x128xf32>
      %51 = arith.addf %42, %50 : vector<192x128xf32>
      %c7 = arith.constant 7 : index
      %c0_38 = arith.constant 0 : index
      %c0_39 = arith.constant 0 : index
      %52 = vector.load %arg2[%c7, %c0_38, %c0_39] : memref<9x128x128xbf16, #tpu.memory_space<vmem>>, vector<1x128x128xbf16>
      %53 = vector.shape_cast %52 : vector<1x128x128xbf16> to vector<128x128xbf16>
      %cst_40 = arith.constant dense<0.000000e+00> : vector<192x128xf32>
      %54 = tpu.matmul %47, %53, %cst_40 {dimension_numbers = #tpu.dot_dimension_numbers<[1], [0], [0], [1], [0, 0, 1, 1], [], []>} : vector<192x128xbf16>, vector<128x128xbf16>, vector<192x128xf32> -> vector<192x128xf32>
      %c191_i32_41 = arith.constant 191 : i32
      %55 = tpu.dynamic_rotate %54 by %c191_i32_41 dim 0 : vector<192x128xf32>, i32 -> vector<192x128xf32>
      %56 = arith.addf %51, %55 : vector<192x128xf32>
      %c8 = arith.constant 8 : index
      %c0_42 = arith.constant 0 : index
      %c0_43 = arith.constant 0 : index
      %57 = vector.load %arg2[%c8, %c0_42, %c0_43] : memref<9x128x128xbf16, #tpu.memory_space<vmem>>, vector<1x128x128xbf16>
      %58 = vector.shape_cast %57 : vector<1x128x128xbf16> to vector<128x128xbf16>
      %cst_44 = arith.constant dense<0.000000e+00> : vector<192x128xf32>
      %59 = tpu.matmul %47, %58, %cst_44 {dimension_numbers = #tpu.dot_dimension_numbers<[1], [0], [0], [1], [0, 0, 1, 1], [], []>} : vector<192x128xbf16>, vector<128x128xbf16>, vector<192x128xf32> -> vector<192x128xf32>
      %c190_i32_45 = arith.constant 190 : i32
      %60 = tpu.dynamic_rotate %59 by %c190_i32_45 dim 0 : vector<192x128xf32>, i32 -> vector<192x128xf32>
      %61 = arith.addf %56, %60 : vector<192x128xf32>
      %62 = vector.broadcast %0 : vector<1x128xf32> to vector<192x128xf32>
      %63 = arith.addf %61, %62 : vector<192x128xf32>
      %cst_46 = arith.constant 0.000000e+00 : f32
      %64 = vector.broadcast %cst_46 : f32 to vector<192x128xf32>
      %65 = arith.maximumf %63, %64 : vector<192x128xf32>
      %66 = vector.shape_cast %65 : vector<192x128xf32> to vector<8x24x128xf32>
      %c0_47 = arith.constant 0 : index
      %67 = arith.index_cast %3 : i32 to index
      %c0_48 = arith.constant 0 : index
      %c0_49 = arith.constant 0 : index
      %68 = vector.load %arg4[%c0_47, %67, %c0_48, %c0_49] : memref<1x16x24x128xf32, #tpu.memory_space<vmem>>, vector<1x8x24x128xf32>
      %69 = vector.shape_cast %68 : vector<1x8x24x128xf32> to vector<8x24x128xf32>
      %70 = vector.shape_cast %66 : vector<8x24x128xf32> to vector<1x8x24x128xf32>
      tpu.vector_store %arg4[%c0_47, %67, %c0_48, %c0_49], %70 {strides = array<i32>} : memref<1x16x24x128xf32, #tpu.memory_space<vmem>>, vector<1x8x24x128xf32>,
    }
    %c2_i32_1 = arith.constant 2 : i32
    return
  }
  func.func @transform_0(%arg0: i32) -> (i32, i32, i32, i32) {
    %c0_i32 = arith.constant 0 : i32
    %c0_i32_0 = arith.constant 0 : i32
    %c0_i32_1 = arith.constant 0 : i32
    %c0_i32_2 = arith.constant 0 : i32
    return %arg0, %c0_i32, %c0_i32_0, %c0_i32_1 : i32, i32, i32, i32
  }
  func.func @transform_1(%arg0: i32) -> (i32, i32, i32) {
    %c0_i32 = arith.constant 0 : i32
    %c0_i32_0 = arith.constant 0 : i32
    %c0_i32_1 = arith.constant 0 : i32
    %c0_i32_2 = arith.constant 0 : i32
    return %c0_i32, %c0_i32_0, %c0_i32_1 : i32, i32, i32
  }
  func.func @transform_2(%arg0: i32) -> (i32, i32) {
    %c0_i32 = arith.constant 0 : i32
    %c0_i32_0 = arith.constant 0 : i32
    %c0_i32_1 = arith.constant 0 : i32
    return %c0_i32, %c0_i32_0 : i32, i32
  }
  func.func @transform_3(%arg0: i32) -> (i32, i32, i32, i32) {
    %c0_i32 = arith.constant 0 : i32
    %c0_i32_0 = arith.constant 0 : i32
    %c0_i32_1 = arith.constant 0 : i32
    %c0_i32_2 = arith.constant 0 : i32
    return %arg0, %c0_i32, %c0_i32_0, %c0_i32_1 : i32, i32, i32, i32
  }
}

</mosaic_0001>

<llo_original>
// kernel: tpu_custom_call.1
$region0: #{tpu_custom_call.1}
  #allocation0 [shape = 'u32[]', space=smem, size = 0x4, offset = 0x4, fixed_abs, tag = 'smem constant byte address 0x4 - core index']
  #allocation1 [shape = 'u32[144,128]{1,0:T(1,128)}', space=vmem, size = 0x12000, scoped, tag = 'internal scratch']
  %s0 = inlined_call_operand.hbm [shape: bf16[2,18,24,128], index: 0, kind: input, shape index: {}]
  %s1 = inlined_call_operand.hbm [shape: bf16[9,128,128], index: 1, kind: input, shape index: {}]
  %s2 = inlined_call_operand.vmem [shape: f32[1,128], index: 2, kind: input, shape index: {}]
  %s3 = inlined_call_operand.hbm [shape: f32[2,16,24,128], index: 3, kind: output, shape index: {}]
  %s4 = sld [smem:[#allocation0]]
  $region60: #{tpu_custom_call.1} parent=0
    _
  %s6 = ssub.s32 1, %s4
  %s7 = scalar_select 0, %s6, %s4
  $region1: #{tpu_custom_call.1} parent=0
    #allocation2 [shape = 'u8[221184]{0}', space=vmem, size = 0x36000, scoped, tag = 'input window, operand 0']
    #allocation3 [shape = 's32[2]{0}', space=sflag, size = 0x8, scoped, tag = 'scoped memory for tpu_custom_call.1']
    #allocation4 [shape = 's32[2]{0}', space=sflag, size = 0x8, scoped, tag = 'scoped memory for tpu_custom_call.1']
    #allocation5 [shape = 'u8[294912]{0}', space=vmem, size = 0x48000, scoped, tag = 'input window, operand 1, single buffered']
    #allocation6 [shape = 's32[1]{0}', space=sflag, size = 0x4, scoped, tag = 'scoped memory for tpu_custom_call.1']
    #allocation7 [shape = 'u8[393216]{0}', space=vmem, size = 0x60000, scoped, tag = 'output window, operand 0']
    %8 = vsyncpa [#allocation3], 0
    %s9 = scalar_lea.sflag [#allocation3], 1
    %10 = vsyncpa %s9, 0
    %11 = vsyncpa [#allocation6], 0
    %12 = vsyncpa [#allocation4], 0
    %s13 = scalar_lea.sflag [#allocation4], 1
    %14 = vsyncpa %s13, 0
    loop: start=0, step=1, limit=4
    $region2: #{tpu_custom_call.1} parent=1 // loop_pre_header
      _
    $region3: #{tpu_custom_call.1} parent=1 // loop_header
      %s16 = sphi 0, %s20
      %p17 = scmp.ge.s32.totalorder %s16, 4
      %s26 = sphi 0, %s28
      %s29 = sphi 0, %s26
      %s30 = sphi 0, %s29
      %s46 = sphi 0, %s30
      %s50 = sphi 0, %s50
      %s52 = sphi 0, %s50
      %s53 = sphi 0, %s52
      %s67 = sphi 0, %s53
      %s71 = sphi 0, %s71
      %s73 = sphi 0, %s71
      %s74 = sphi 0, %s73
      %s88 = sphi 0, %s74
      %s94 = sphi 0, %s96
      %s97 = sphi 0, %s94
      %s98 = sphi 0, %s97
      %s114 = sphi 0, %s98
    $region4: #{tpu_custom_call.1} parent=1 // loop_header_branch
      %19 = sbr.rel (%p17) target = $region8
    $region5: #{tpu_custom_call.1} parent=1 // loop_body
      %s21 = ssub.s32 %s16, 1
      %s22 = ssub.s32 %s16, 2
      %s23 = sadd.s32 %s16, 1
      %s24 = ssub.s32 %s16, %s23
      %p25 = scmp.eq.s32.totalorder %s24, 0
      %s27 = sadd.s32 %s26, 1
      %s28 = scalar_select %p25, %s26, %s27
      %p31 = pneg %p25
      %p32 = scmp.eq.s32.totalorder %s16, 1
      %p33 = por %p31, %p32
      %p34 = scmp.ne.s32.totalorder %s26, %s29
      %p35 = scmp.eq.s32.totalorder %s16, 0
      %p36 = por %p34, %p35
      %p37 = scmp.ne.s32.totalorder %s26, %s29
      %p38 = scmp.eq.s32.totalorder %s21, 1
      %p39 = por %p37, %p38
      %p40 = scmp.ne.s32.totalorder %s29, %s30
      %p41 = scmp.eq.s32.totalorder %s21, 0
      %p42 = por %p40, %p41
      %p43 = scmp.ne.s32.totalorder %s29, %s30
      %p44 = scmp.eq.s32.totalorder %s22, 1
      %p45 = por %p43, %p44
      %p47 = scmp.ne.s32.totalorder %s30, %s46
      %p48 = scmp.eq.s32.totalorder %s22, 0
      %p49 = por %p47, %p48
      %s51 = sadd.s32 %s50, 1
      %p54 = scmp.eq.s32.totalorder %s16, 1
      %p55 = scmp.ne.s32.totalorder %s50, %s52
      %p56 = scmp.eq.s32.totalorder %s16, 0
      %p57 = por %p55, %p56
      %p58 = scmp.ne.s32.totalorder %s50, %s52
      %p59 = scmp.eq.s32.totalorder %s21, 1
      %p60 = por %p58, %p59
      %p61 = scmp.ne.s32.totalorder %s52, %s53
      %p62 = scmp.eq.s32.totalorder %s21, 0
      %p63 = por %p61, %p62
      %p64 = scmp.ne.s32.totalorder %s52, %s53
      %p65 = scmp.eq.s32.totalorder %s22, 1
      %p66 = por %p64, %p65
      %p68 = scmp.ne.s32.totalorder %s53, %s67
      %p69 = scmp.eq.s32.totalorder %s22, 0
      %p70 = por %p68, %p69
      %s72 = sadd.s32 %s71, 1
      %p75 = scmp.eq.s32.totalorder %s16, 1
      %p76 = scmp.ne.s32.totalorder %s71, %s73
      %p77 = scmp.eq.s32.totalorder %s16, 0
      %p78 = por %p76, %p77
      %p79 = scmp.ne.s32.totalorder %s71, %s73
      %p80 = scmp.eq.s32.totalorder %s21, 1
      %p81 = por %p79, %p80
      %p82 = scmp.ne.s32.totalorder %s73, %s74
      %p83 = scmp.eq.s32.totalorder %s21, 0
      %p84 = por %p82, %p83
      %p85 = scmp.ne.s32.totalorder %s73, %s74
      %p86 = scmp.eq.s32.totalorder %s22, 1
      %p87 = por %p85, %p86
      %p89 = scmp.ne.s32.totalorder %s74, %s88
      %p90 = scmp.eq.s32.totalorder %s22, 0
      %p91 = por %p89, %p90
      %s92 = ssub.s32 %s16, %s23
      %p93 = scmp.eq.s32.totalorder %s92, 0
      %s95 = sadd.s32 %s94, 1
      %s96 = scalar_select %p93, %s94, %s95
      %p99 = pneg %p93
      %p100 = scmp.eq.s32.totalorder %s16, 1
      %p101 = por %p99, %p100
      %p102 = scmp.ne.s32.totalorder %s94, %s97
      %p103 = scmp.eq.s32.totalorder %s16, 0
      %p104 = por %p102, %p103
      %p105 = scmp.ne.s32.totalorder %s94, %s97
      %p106 = scmp.eq.s32.totalorder %s21, 1
      %p107 = por %p105, %p106
      %p108 = scmp.ne.s32.totalorder %s97, %s98
      %p109 = scmp.eq.s32.totalorder %s21, 0
      %p110 = por %p108, %p109
      %p111 = scmp.ne.s32.totalorder %s97, %s98
      %p112 = scmp.eq.s32.totalorder %s22, 1
      %p113 = por %p111, %p112
      %p115 = scmp.ne.s32.totalorder %s98, %s114
      %p116 = scmp.eq.s32.totalorder %s22, 0
      %p117 = por %p115, %p116
      %p118 = scmp.le.s32.totalorder 1, %s16
      %p119 = scmp.lt.s32.totalorder %s16, 3
      %p120 = pnand %p118, %p119
      %p121 = pneg %p120
      // Predicated region
      $region9: #{tpu_custom_call.1} parent=5 // pred_check
        _
      $region10: #{tpu_custom_call.1} parent=5 // pred_check_branch
        %123 = sbr.rel (%p120) target = $region12
      $region11: #{tpu_custom_call.1} parent=5 // pred_region
        %s124 = ssub.s32 %s16, 1
        // Predicated region
        $region13: #{tpu_custom_call.1} parent=11 // pred_check
          %p125 = pneg %p63
        $region14: #{tpu_custom_call.1} parent=11 // pred_check_branch
          %127 = sbr.rel (%p125) target = $region16
        $region15: #{tpu_custom_call.1} parent=11 // pred_region
          %s129 = ssub.s32 9216, 9216
          %130 = vsyncadd [#allocation6], %s129
          %s131 = sshll.u32 [#allocation5], 4
          %s132 = int_to_ptr.vmem [resolvable:$true] %s131
          %137 = dma.hbm_to_vmem [thread:$0]  %s1, 9216, %s132, [#allocation6], 64, 64, 4
        $region16: #{tpu_custom_call.1} parent=11 // pred_fallthru
          _
        // Predicated region
        $region17: #{tpu_custom_call.1} parent=11 // pred_check
          %p138 = pneg %p84
        $region18: #{tpu_custom_call.1} parent=11 // pred_check_branch
          %140 = sbr.rel (%p138) target = $region20
        $region19: #{tpu_custom_call.1} parent=11 // pred_region
          _
        $region20: #{tpu_custom_call.1} parent=11 // pred_fallthru
          _
      $region12: #{tpu_custom_call.1} parent=5 // pred_fallthru
        _
      %p141 = scmp.lt.s32.totalorder %s16, 2
      // Predicated region
      $region21: #{tpu_custom_call.1} parent=5 // pred_check
        %p142 = pneg %p141
      $region22: #{tpu_custom_call.1} parent=5 // pred_check_branch
        %144 = sbr.rel (%p142) target = $region24
      $region23: #{tpu_custom_call.1} parent=5 // pred_region
        // Predicated region
        $region25: #{tpu_custom_call.1} parent=23 // pred_check
          %p145 = pneg %p36
        $region26: #{tpu_custom_call.1} parent=23 // pred_check_branch
          %147 = sbr.rel (%p145) target = $region28
        $region27: #{tpu_custom_call.1} parent=23 // pred_region
          %s148 = sand.u32 %s26, 1
          %s149 = scalar_lea.sflag [#allocation3], %s148
          %s150 = sand.u32 %s26, 1
          %s151 = smul.addr %s150, 216
          %s152 = scalar_lea.vmem [#allocation2], %s151
          %s154 = ssub.s32 3456, 3456
          %155 = vsyncadd %s149, %s154
          %s156 = smul.addr %s16, 54
          %s157 = smul.addr %s156, 64
          %s158 = scalar_lea.hbm %s0, %s157
          %s159 = sshll.u32 %s152, 4
          %s160 = int_to_ptr.vmem [resolvable:$true] %s159
          %165 = dma.hbm_to_vmem [thread:$0]  %s158, 3456, %s160, %s149, 64, 64, 4
        $region28: #{tpu_custom_call.1} parent=23 // pred_fallthru
          _
      $region24: #{tpu_custom_call.1} parent=5 // pred_fallthru
        _
      %p166 = scmp.le.s32.totalorder 1, %s16
      %p167 = scmp.lt.s32.totalorder %s16, 3
      %p168 = pnand %p166, %p167
      %p169 = pneg %p168
      // Predicated region
      $region29: #{tpu_custom_call.1} parent=5 // pred_check
        _
      $region30: #{tpu_custom_call.1} parent=5 // pred_check_branch
        %171 = sbr.rel (%p168) target = $region32
      $region31: #{tpu_custom_call.1} parent=5 // pred_region
        %s172 = ssub.s32 %s16, 1
        %s173 = sand.u32 %s29, 1
        %s174 = scalar_lea.sflag [#allocation3], %s173
        %s175 = sand.u32 %s29, 1
        %s176 = smul.addr %s175, 216
        %s177 = scalar_lea.vmem [#allocation2], %s176
        // Predicated region
        $region33: #{tpu_custom_call.1} parent=31 // pred_check
          %p178 = pneg %p42
        $region34: #{tpu_custom_call.1} parent=31 // pred_check_branch
          %180 = sbr.rel (%p178) target = $region36
        $region35: #{tpu_custom_call.1} parent=31 // pred_region
          %181 = dma.done %s174, 3456
        $region36: #{tpu_custom_call.1} parent=31 // pred_fallthru
          _
        // Predicated region
        $region37: #{tpu_custom_call.1} parent=31 // pred_check
          %p182 = pneg %p63
        $region38: #{tpu_custom_call.1} parent=31 // pred_check_branch
          %184 = sbr.rel (%p182) target = $region40
        $region39: #{tpu_custom_call.1} parent=31 // pred_region
          %185 = dma.done [#allocation6], 9216
        $region40: #{tpu_custom_call.1} parent=31 // pred_fallthru
          _
        %s186 = sand.u32 %s29, 1
        %s187 = scalar_lea.sflag [#allocation3], %s186
        %s188 = sand.u32 %s29, 1
        %s189 = smul.addr %s188, 216
        %s190 = scalar_lea.vmem [#allocation2], %s189
        %p191 = pneg %p42
        %p192 = pneg %p39
        %p193 = pneg %p63
        %p194 = pneg %p60
        %p195 = pneg %p84
        %p196 = pneg %p81
        %p197 = pneg %p110
        %p198 = pneg %p107
        %s199 = sand.u32 %s97, 1
        %s200 = scalar_lea.sflag [#allocation4], %s199
        %s201 = sand.u32 %s97, 1
        %s202 = smul.addr %s201, 384
        %s203 = scalar_lea.vmem [#allocation7], %s202
        %v205 = vld [vmem:[%s2] sm:$0x1]
        loop: start=0, step=1, limit=2
        $region41: #{tpu_custom_call.1} parent=31 // loop_pre_header
          _
        $region42: #{tpu_custom_call.1} parent=31 // loop_header
          %s207 = sphi 0, %s211
          %p208 = scmp.ge.s32.totalorder %s207, 2
        $region43: #{tpu_custom_call.1} parent=31 // loop_header_branch
          %210 = sbr.rel (%p208) target = $region47
        $region44: #{tpu_custom_call.1} parent=31 // loop_body
          %s212 = smul.u32 %s207, 8
          %s213 = smul.u32 %s212, 3
          %s214 = smul.addr %s213, 4
          %s215 = scalar_lea.vmem %s177, %s214 [#allocation2]
          %v216 = vld [vmem:[%s215] sm:$0xf]
          %v217 = vld [vmem:[%s215 + $0x4] sm:$0xf]
          %v218 = vld [vmem:[%s215 + $0x8] sm:$0xf]
          %v219 = vld [vmem:[%s215 + $0xc] sm:$0xf]
          %v220 = vld [vmem:[%s215 + $0x10] sm:$0xf]
          %v221 = vld [vmem:[%s215 + $0x14] sm:$0xf]
          %v222 = vld [vmem:[%s215 + $0x18] sm:$0xf]
          %v223 = vld [vmem:[%s215 + $0x1c] sm:$0xf]
          %v224 = vld [vmem:[%s215 + $0x20] sm:$0xf]
          %v225 = vld [vmem:[%s215 + $0x24] sm:$0xf]
          %v226 = vld [vmem:[%s215 + $0x28] sm:$0xf]
          %v227 = vld [vmem:[%s215 + $0x2c] sm:$0xf]
          %v228 = vld [vmem:[%s215 + $0x30] sm:$0xf]
          %v229 = vld [vmem:[%s215 + $0x34] sm:$0xf]
          %v230 = vld [vmem:[%s215 + $0x38] sm:$0xf]
          %v231 = vld [vmem:[%s215 + $0x3c] sm:$0xf]
          %v232 = vld [vmem:[%s215 + $0x40] sm:$0xf]
          %v233 = vld [vmem:[%s215 + $0x44] sm:$0xf]
          %v234 = vld [vmem:[%s215 + $0x48] sm:$0xf]
          %v235 = vld [vmem:[%s215 + $0x4c] sm:$0xf]
          %v236 = vld [vmem:[%s215 + $0x50] sm:$0xf]
          %v237 = vld [vmem:[%s215 + $0x54] sm:$0xf]
          %v238 = vld [vmem:[%s215 + $0x58] sm:$0xf]
          %v239 = vld [vmem:[%s215 + $0x5c] sm:$0xf]
          %v240 = vld [vmem:[#allocation5] sm:$0xf]
          %v241 = vld [vmem:[#allocation5 + $0x4] sm:$0xf]
          %v242 = vld [vmem:[#allocation5 + $0x8] sm:$0xf]
          %v243 = vld [vmem:[#allocation5 + $0xc] sm:$0xf]
          %v244 = vld [vmem:[#allocation5 + $0x10] sm:$0xf]
          %v245 = vld [vmem:[#allocation5 + $0x14] sm:$0xf]
          %v246 = vld [vmem:[#allocation5 + $0x18] sm:$0xf]
          %v247 = vld [vmem:[#allocation5 + $0x1c] sm:$0xf]
          %v248 = vld [vmem:[#allocation5 + $0x20] sm:$0xf]
          %v249 = vld [vmem:[#allocation5 + $0x24] sm:$0xf]
          %v250 = vld [vmem:[#allocation5 + $0x28] sm:$0xf]
          %v251 = vld [vmem:[#allocation5 + $0x2c] sm:$0xf]
          %v252 = vld [vmem:[#allocation5 + $0x30] sm:$0xf]
          %v253 = vld [vmem:[#allocation5 + $0x34] sm:$0xf]
          %v254 = vld [vmem:[#allocation5 + $0x38] sm:$0xf]
          %v255 = vld [vmem:[#allocation5 + $0x3c] sm:$0xf]
          %s256 = scalar_lea.vmem [#allocation5], 64
          %v257 = vld [vmem:[%s256] sm:$0xf]
          %v258 = vld [vmem:[%s256 + $0x4] sm:$0xf]
          %v259 = vld [vmem:[%s256 + $0x8] sm:$0xf]
          %v260 = vld [vmem:[%s256 + $0xc] sm:$0xf]
          %v261 = vld [vmem:[%s256 + $0x10] sm:$0xf]
          %v262 = vld [vmem:[%s256 + $0x14] sm:$0xf]
          %v263 = vld [vmem:[%s256 + $0x18] sm:$0xf]
          %v264 = vld [vmem:[%s256 + $0x1c] sm:$0xf]
          %v265 = vld [vmem:[%s256 + $0x20] sm:$0xf]
          %v266 = vld [vmem:[%s256 + $0x24] sm:$0xf]
          %v267 = vld [vmem:[%s256 + $0x28] sm:$0xf]
          %v268 = vld [vmem:[%s256 + $0x2c] sm:$0xf]
          %v269 = vld [vmem:[%s256 + $0x30] sm:$0xf]
          %v270 = vld [vmem:[%s256 + $0x34] sm:$0xf]
          %v271 = vld [vmem:[%s256 + $0x38] sm:$0xf]
          %v272 = vld [vmem:[%s256 + $0x3c] sm:$0xf]
          %v297 = vunpack.c.l.b16 %v216
          %v298 = vunpack.c.l.b16 %v217
          %v299 = vunpack.c.l.b16 %v218
          %v300 = vunpack.c.l.b16 %v219
          %v301 = vunpack.c.l.b16 %v220
          %v302 = vunpack.c.l.b16 %v221
          %v303 = vunpack.c.l.b16 %v222
          %v304 = vunpack.c.l.b16 %v223
          %v305 = vunpack.c.l.b16 %v224
          %v306 = vunpack.c.l.b16 %v225
          %v307 = vunpack.c.l.b16 %v226
          %v308 = vunpack.c.l.b16 %v227
          %v309 = vunpack.c.l.b16 %v228
          %v310 = vunpack.c.l.b16 %v229
          %v311 = vunpack.c.l.b16 %v230
          %v312 = vunpack.c.l.b16 %v231
          %v313 = vunpack.c.l.b16 %v232
          %v314 = vunpack.c.l.b16 %v233
          %v315 = vunpack.c.l.b16 %v234
          %v316 = vunpack.c.l.b16 %v235
          %v317 = vunpack.c.l.b16 %v236
          %v318 = vunpack.c.l.b16 %v237
          %v319 = vunpack.c.l.b16 %v238
          %v320 = vunpack.c.l.b16 %v239
          %v321 = vpack.c.b16 %v298, %v297
          %v322 = vpack.c.b16 %v300, %v299
          %v323 = vpack.c.b16 %v302, %v301
          %v324 = vpack.c.b16 %v304, %v303
          %v325 = vpack.c.b16 %v306, %v305
          %v326 = vpack.c.b16 %v308, %v307
          %v327 = vpack.c.b16 %v310, %v309
          %v328 = vpack.c.b16 %v312, %v311
          %v329 = vpack.c.b16 %v314, %v313
          %v330 = vpack.c.b16 %v316, %v315
          %v331 = vpack.c.b16 %v318, %v317
          %v332 = vpack.c.b16 %v320, %v319
          %v361 = vunpack.c.l.b16 %v257
          %v362 = vunpack.c.l.b16 %v258
          %v363 = vunpack.c.l.b16 %v259
          %v364 = vunpack.c.l.b16 %v260
          %v365 = vunpack.c.l.b16 %v261
          %v366 = vunpack.c.l.b16 %v262
          %v367 = vunpack.c.l.b16 %v263
          %v368 = vunpack.c.l.b16 %v264
          %v369 = vunpack.c.l.b16 %v265
          %v370 = vunpack.c.l.b16 %v266
          %v371 = vunpack.c.l.b16 %v267
          %v372 = vunpack.c.l.b16 %v268
          %v373 = vunpack.c.l.b16 %v269
          %v374 = vunpack.c.l.b16 %v270
          %v375 = vunpack.c.l.b16 %v271
          %v376 = vunpack.c.l.b16 %v272
          %v377 = vpack.c.b16 %v362, %v361
          %v378 = vpack.c.b16 %v364, %v363
          %v379 = vpack.c.b16 %v366, %v365
          %v380 = vpack.c.b16 %v368, %v367
          %v381 = vpack.c.b16 %v370, %v369
          %v382 = vpack.c.b16 %v372, %v371
          %v383 = vpack.c.b16 %v374, %v373
          %v384 = vpack.c.b16 %v376, %v375
          %393 = vmatprep.subr.bf16.mxu0 0
          %394 = vmatpush1.bf16.msra.mxu0 %v377
          %395 = vmatprep.subr.bf16.mxu0 0
          %396 = vmatpush1.bf16.msra.mxu0 %v378
          %397 = vmatprep.subr.bf16.mxu0 0
          %398 = vmatpush1.bf16.msra.mxu0 %v379
          %399 = vmatprep.subr.bf16.mxu0 0
          %400 = vmatpush1.bf16.msra.mxu0 %v380
          %401 = vmatprep.subr.bf16.mxu0 0
          %402 = vmatpush1.bf16.msra.mxu0 %v381
          %403 = vmatprep.subr.bf16.mxu0 0
          %404 = vmatpush1.bf16.msra.mxu0 %v382
          %405 = vmatprep.subr.bf16.mxu0 0
          %406 = vmatpush1.bf16.msra.mxu0 %v383
          %407 = vmatprep.subr.bf16.mxu0 0
          %408 = vmatpush1.bf16.msra.mxu0 %v384
          %409 = vmatprep.subr.bf16.mxu0 0
          %410 = vmatpush1.bf16.msra.mxu0 0
          %411 = vmatprep.subr.bf16.mxu0 0
          %412 = vmatpush1.bf16.msra.mxu0 0
          %413 = vmatprep.subr.bf16.mxu0 0
          %414 = vmatpush1.bf16.msra.mxu0 0
          %415 = vmatprep.subr.bf16.mxu0 0
          %416 = vmatpush1.bf16.msra.mxu0 0
          %417 = vmatprep.subr.bf16.mxu0 0
          %418 = vmatpush1.bf16.msra.mxu0 0
          %419 = vmatprep.subr.bf16.mxu0 0
          %420 = vmatpush1.bf16.msra.mxu0 0
          %421 = vmatprep.subr.bf16.mxu0 0
          %422 = vmatpush1.bf16.msra.mxu0 0
          %423 = vmatprep.subr.bf16.mxu0 0
          %424 = vmatpush1.bf16.msra.mxu0 0
          %425 = vmatprep.mubr.bf16.mxu0 0
          %426 = vmatmul.mubr.bf16.gmra.mrb[0].mxu0 %v321
          %v427 = vpop.f32.mrb[0].mxu0
          %v428 = vadd.f32 0.0, %v427
          %v429 = vpop.f32.mrb[0].mxu0
          %v430 = vpop.f32.mrb[0].mxu0
          %v431 = vadd.f32 0.0, %v430
          %v432 = vpop.f32.mrb[0].mxu0
          %433 = vmatprep.mubr.bf16.mxu0 0
          %434 = vmatmul.mubr.bf16.gmra.mrb[0].mxu0 %v322
          %v435 = vpop.f32.mrb[0].mxu0
          %v436 = vadd.f32 0.0, %v435
          %v437 = vpop.f32.mrb[0].mxu0
          %v438 = vpop.f32.mrb[0].mxu0
          %v439 = vadd.f32 0.0, %v438
          %v440 = vpop.f32.mrb[0].mxu0
          %441 = vmatprep.mubr.bf16.mxu0 0
          %442 = vmatmul.mubr.bf16.gmra.mrb[0].mxu0 %v323
          %v443 = vpop.f32.mrb[0].mxu0
          %v444 = vadd.f32 0.0, %v443
          %v445 = vpop.f32.mrb[0].mxu0
          %v446 = vpop.f32.mrb[0].mxu0
          %v447 = vadd.f32 0.0, %v446
          %v448 = vpop.f32.mrb[0].mxu0
          %449 = vmatprep.mubr.bf16.mxu0 0
          %450 = vmatmul.mubr.bf16.gmra.mrb[0].mxu0 %v324
          %v451 = vpop.f32.mrb[0].mxu0
          %v452 = vadd.f32 0.0, %v451
          %v453 = vpop.f32.mrb[0].mxu0
          %v454 = vpop.f32.mrb[0].mxu0
          %v455 = vadd.f32 0.0, %v454
          %v456 = vpop.f32.mrb[0].mxu0
          %457 = vmatprep.mubr.bf16.mxu0 0
          %458 = vmatmul.mubr.bf16.gmra.mrb[0].mxu0 %v325
          %v459 = vpop.f32.mrb[0].mxu0
          %v460 = vadd.f32 0.0, %v459
          %v461 = vpop.f32.mrb[0].mxu0
          %v462 = vpop.f32.mrb[0].mxu0
          %v463 = vadd.f32 0.0, %v462
          %v464 = vpop.f32.mrb[0].mxu0
          %465 = vmatprep.mubr.bf16.mxu0 0
          %466 = vmatmul.mubr.bf16.gmra.mrb[0].mxu0 %v326
          %v467 = vpop.f32.mrb[0].mxu0
          %v468 = vadd.f32 0.0, %v467
          %v469 = vpop.f32.mrb[0].mxu0
          %v470 = vpop.f32.mrb[0].mxu0
          %v471 = vadd.f32 0.0, %v470
          %v472 = vpop.f32.mrb[0].mxu0
          %473 = vmatprep.mubr.bf16.mxu0 0
          %474 = vmatmul.mubr.bf16.gmra.mrb[0].mxu0 %v327
          %v475 = vpop.f32.mrb[0].mxu0
          %v476 = vadd.f32 0.0, %v475
          %v477 = vpop.f32.mrb[0].mxu0
          %v478 = vpop.f32.mrb[0].mxu0
          %v479 = vadd.f32 0.0, %v478
          %v480 = vpop.f32.mrb[0].mxu0
          %481 = vmatprep.mubr.bf16.mxu0 0
          %482 = vmatmul.mubr.bf16.gmra.mrb[0].mxu0 %v328
          %v483 = vpop.f32.mrb[0].mxu0
          %v484 = vadd.f32 0.0, %v483
          %v485 = vpop.f32.mrb[0].mxu0
          %v486 = vpop.f32.mrb[0].mxu0
          %v487 = vadd.f32 0.0, %v486
          %v488 = vpop.f32.mrb[0].mxu0
          %489 = vmatprep.mubr.bf16.mxu0 0
          %490 = vmatmul.mubr.bf16.gmra.mrb[0].mxu0 %v329
          %v491 = vpop.f32.mrb[0].mxu0
          %v492 = vadd.f32 0.0, %v491
          %v493 = vpop.f32.mrb[0].mxu0
          %v494 = vpop.f32.mrb[0].mxu0
          %v495 = vadd.f32 0.0, %v494
          %v496 = vpop.f32.mrb[0].mxu0
          %497 = vmatprep.mubr.bf16.mxu0 0
          %498 = vmatmul.mubr.bf16.gmra.mrb[0].mxu0 %v330
          %v499 = vpop.f32.mrb[0].mxu0
          %v500 = vadd.f32 0.0, %v499
          %v501 = vpop.f32.mrb[0].mxu0
          %v502 = vpop.f32.mrb[0].mxu0
          %v503 = vadd.f32 0.0, %v502
          %v504 = vpop.f32.mrb[0].mxu0
          %505 = vmatprep.mubr.bf16.mxu0 0
          %506 = vmatmul.mubr.bf16.gmra.mrb[0].mxu0 %v331
          %v507 = vpop.f32.mrb[0].mxu0
          %v508 = vadd.f32 0.0, %v507
          %v509 = vpop.f32.mrb[0].mxu0
          %v510 = vpop.f32.mrb[0].mxu0
          %v511 = vadd.f32 0.0, %v510
          %v512 = vpop.f32.mrb[0].mxu0
          %513 = vmatprep.mubr.bf16.mxu0 0
          %514 = vmatmul.mubr.bf16.gmra.mrb[0].mxu0 %v332
          %v515 = vpop.f32.mrb[0].mxu0
          %v516 = vadd.f32 0.0, %v515
          %v517 = vpop.f32.mrb[0].mxu0
          %v518 = vpop.f32.mrb[0].mxu0
          %v519 = vadd.f32 0.0, %v518
          %v520 = vpop.f32.mrb[0].mxu0
          %521 = vdwg.mxu0
          %v522 = vrot.slane %v428, 1
          %v523 = vrot.slane %v431, 1
          %v524 = vrot.slane %v436, 1
          %v525 = vrot.slane %v439, 1
          %v526 = vrot.slane %v444, 1
          %v527 = vrot.slane %v447, 1
          %v528 = vrot.slane %v452, 1
          %v529 = vrot.slane %v455, 1
          %v530 = vrot.slane %v460, 1
          %v531 = vrot.slane %v463, 1
          %v532 = vrot.slane %v468, 1
          %v533 = vrot.slane %v471, 1
          %v534 = vrot.slane %v476, 1
          %v535 = vrot.slane %v479, 1
          %v536 = vrot.slane %v484, 1
          %v537 = vrot.slane %v487, 1
          %v538 = vrot.slane %v492, 1
          %v539 = vrot.slane %v495, 1
          %v540 = vrot.slane %v500, 1
          %v541 = vrot.slane %v503, 1
          %v542 = vrot.slane %v508, 1
          %v543 = vrot.slane %v511, 1
          %v544 = vrot.slane %v516, 1
          %v545 = vrot.slane %v519, 1
          %v546 = vlaneseq
          %v547 = vshrl.u32 %v546, 7
          %vm548 = vcmp.lt.s32.totalorder %v547, 7
          %v549 = vsel %vm548, %v544, %v545
          %v550 = vsel %vm548, %v543, %v544
          %v551 = vsel %vm548, %v542, %v543
          %v552 = vsel %vm548, %v541, %v542
          %v553 = vsel %vm548, %v540, %v541
          %v554 = vsel %vm548, %v539, %v540
          %v555 = vsel %vm548, %v538, %v539
          %v556 = vsel %vm548, %v537, %v538
          %v557 = vsel %vm548, %v536, %v537
          %v558 = vsel %vm548, %v535, %v536
          %v559 = vsel %vm548, %v534, %v535
          %v560 = vsel %vm548, %v533, %v534
          %v561 = vsel %vm548, %v532, %v533
          %v562 = vsel %vm548, %v531, %v532
          %v563 = vsel %vm548, %v530, %v531
          %v564 = vsel %vm548, %v529, %v530
          %v565 = vsel %vm548, %v528, %v529
          %v566 = vsel %vm548, %v527, %v528
          %v567 = vsel %vm548, %v526, %v527
          %v568 = vsel %vm548, %v525, %v526
          %v569 = vsel %vm548, %v524, %v525
          %v570 = vsel %vm548, %v523, %v524
          %v571 = vsel %vm548, %v522, %v523
          %v572 = vsel %vm548, %v545, %v522
          %v589 = vunpack.c.l.b16 %v240
          %v590 = vunpack.c.l.b16 %v241
          %v591 = vunpack.c.l.b16 %v242
          %v592 = vunpack.c.l.b16 %v243
          %v593 = vunpack.c.l.b16 %v244
          %v594 = vunpack.c.l.b16 %v245
          %v595 = vunpack.c.l.b16 %v246
          %v596 = vunpack.c.l.b16 %v247
          %v597 = vunpack.c.l.b16 %v248
          %v598 = vunpack.c.l.b16 %v249
          %v599 = vunpack.c.l.b16 %v250
          %v600 = vunpack.c.l.b16 %v251
          %v601 = vunpack.c.l.b16 %v252
          %v602 = vunpack.c.l.b16 %v253
          %v603 = vunpack.c.l.b16 %v254
          %v604 = vunpack.c.l.b16 %v255
          %v605 = vpack.c.b16 %v590, %v589
          %v606 = vpack.c.b16 %v592, %v591
          %v607 = vpack.c.b16 %v594, %v593
          %v608 = vpack.c.b16 %v596, %v595
          %v609 = vpack.c.b16 %v598, %v597
          %v610 = vpack.c.b16 %v600, %v599
          %v611 = vpack.c.b16 %v602, %v601
          %v612 = vpack.c.b16 %v604, %v603
          %621 = vmatprep.subr.bf16.mxu0 0
          %622 = vmatpush1.bf16.msra.mxu0 %v605
          %623 = vmatprep.subr.bf16.mxu0 0
          %624 = vmatpush1.bf16.msra.mxu0 %v606
          %625 = vmatprep.subr.bf16.mxu0 0
          %626 = vmatpush1.bf16.msra.mxu0 %v607
          %627 = vmatprep.subr.bf16.mxu0 0
          %628 = vmatpush1.bf16.msra.mxu0 %v608
          %629 = vmatprep.subr.bf16.mxu0 0
          %630 = vmatpush1.bf16.msra.mxu0 %v609
          %631 = vmatprep.subr.bf16.mxu0 0
          %632 = vmatpush1.bf16.msra.mxu0 %v610
          %633 = vmatprep.subr.bf16.mxu0 0
          %634 = vmatpush1.bf16.msra.mxu0 %v611
          %635 = vmatprep.subr.bf16.mxu0 0
          %636 = vmatpush1.bf16.msra.mxu0 %v612
          %637 = vmatprep.subr.bf16.mxu0 0
          %638 = vmatpush1.bf16.msra.mxu0 0
          %639 = vmatprep.subr.bf16.mxu0 0
          %640 = vmatpush1.bf16.msra.mxu0 0
          %641 = vmatprep.subr.bf16.mxu0 0
          %642 = vmatpush1.bf16.msra.mxu0 0
          %643 = vmatprep.subr.bf16.mxu0 0
          %644 = vmatpush1.bf16.msra.mxu0 0
          %645 = vmatprep.subr.bf16.mxu0 0
          %646 = vmatpush1.bf16.msra.mxu0 0
          %647 = vmatprep.subr.bf16.mxu0 0
          %648 = vmatpush1.bf16.msra.mxu0 0
          %649 = vmatprep.subr.bf16.mxu0 0
          %650 = vmatpush1.bf16.msra.mxu0 0
          %651 = vmatprep.subr.bf16.mxu0 0
          %652 = vmatpush1.bf16.msra.mxu0 0
          %653 = vmatprep.mubr.bf16.mxu0 0
          %654 = vmatmul.mubr.bf16.gmra.mrb[0].mxu0 %v321
          %v655 = vpop.f32.mrb[0].mxu0
          %v656 = vadd.f32 %v571, %v655
          %v657 = vpop.f32.mrb[0].mxu0
          %v658 = vpop.f32.mrb[0].mxu0
          %v659 = vadd.f32 %v570, %v658
          %v660 = vpop.f32.mrb[0].mxu0
          %661 = vmatprep.mubr.bf16.mxu0 0
          %662 = vmatmul.mubr.bf16.gmra.mrb[0].mxu0 %v322
          %v663 = vpop.f32.mrb[0].mxu0
          %v664 = vadd.f32 %v569, %v663
          %v665 = vpop.f32.mrb[0].mxu0
          %v666 = vpop.f32.mrb[0].mxu0
          %v667 = vadd.f32 %v568, %v666
          %v668 = vpop.f32.mrb[0].mxu0
          %669 = vmatprep.mubr.bf16.mxu0 0
          %670 = vmatmul.mubr.bf16.gmra.mrb[0].mxu0 %v323
          %v671 = vpop.f32.mrb[0].mxu0
          %v672 = vadd.f32 %v567, %v671
          %v673 = vpop.f32.mrb[0].mxu0
          %v674 = vpop.f32.mrb[0].mxu0
          %v675 = vadd.f32 %v566, %v674
          %v676 = vpop.f32.mrb[0].mxu0
          %677 = vmatprep.mubr.bf16.mxu0 0
          %678 = vmatmul.mubr.bf16.gmra.mrb[0].mxu0 %v324
          %v679 = vpop.f32.mrb[0].mxu0
          %v680 = vadd.f32 %v565, %v679
          %v681 = vpop.f32.mrb[0].mxu0
          %v682 = vpop.f32.mrb[0].mxu0
          %v683 = vadd.f32 %v564, %v682
          %v684 = vpop.f32.mrb[0].mxu0
          %685 = vmatprep.mubr.bf16.mxu0 0
          %686 = vmatmul.mubr.bf16.gmra.mrb[0].mxu0 %v325
          %v687 = vpop.f32.mrb[0].mxu0
          %v688 = vadd.f32 %v563, %v687
          %v689 = vpop.f32.mrb[0].mxu0
          %v690 = vpop.f32.mrb[0].mxu0
          %v691 = vadd.f32 %v562, %v690
          %v692 = vpop.f32.mrb[0].mxu0
          %693 = vmatprep.mubr.bf16.mxu0 0
          %694 = vmatmul.mubr.bf16.gmra.mrb[0].mxu0 %v326
          %v695 = vpop.f32.mrb[0].mxu0
          %v696 = vadd.f32 %v561, %v695
          %v697 = vpop.f32.mrb[0].mxu0
          %v698 = vpop.f32.mrb[0].mxu0
          %v699 = vadd.f32 %v560, %v698
          %v700 = vpop.f32.mrb[0].mxu0
          %701 = vmatprep.mubr.bf16.mxu0 0
          %702 = vmatmul.mubr.bf16.gmra.mrb[0].mxu0 %v327
          %v703 = vpop.f32.mrb[0].mxu0
          %v704 = vadd.f32 %v559, %v703
          %v705 = vpop.f32.mrb[0].mxu0
          %v706 = vpop.f32.mrb[0].mxu0
          %v707 = vadd.f32 %v558, %v706
          %v708 = vpop.f32.mrb[0].mxu0
          %709 = vmatprep.mubr.bf16.mxu0 0
          %710 = vmatmul.mubr.bf16.gmra.mrb[0].mxu0 %v328
          %v711 = vpop.f32.mrb[0].mxu0
          %v712 = vadd.f32 %v557, %v711
          %v713 = vpop.f32.mrb[0].mxu0
          %v714 = vpop.f32.mrb[0].mxu0
          %v715 = vadd.f32 %v556, %v714
          %v716 = vpop.f32.mrb[0].mxu0
          %717 = vmatprep.mubr.bf16.mxu0 0
          %718 = vmatmul.mubr.bf16.gmra.mrb[0].mxu0 %v329
          %v719 = vpop.f32.mrb[0].mxu0
          %v720 = vadd.f32 %v555, %v719
          %v721 = vpop.f32.mrb[0].mxu0
          %v722 = vpop.f32.mrb[0].mxu0
          %v723 = vadd.f32 %v554, %v722
          %v724 = vpop.f32.mrb[0].mxu0
          %725 = vmatprep.mubr.bf16.mxu0 0
          %726 = vmatmul.mubr.bf16.gmra.mrb[0].mxu0 %v330
          %v727 = vpop.f32.mrb[0].mxu0
          %v728 = vadd.f32 %v553, %v727
          %v729 = vpop.f32.mrb[0].mxu0
          %v730 = vpop.f32.mrb[0].mxu0
          %v731 = vadd.f32 %v552, %v730
          %v732 = vpop.f32.mrb[0].mxu0
          %733 = vmatprep.mubr.bf16.mxu0 0
          %734 = vmatmul.mubr.bf16.gmra.mrb[0].mxu0 %v331
          %v735 = vpop.f32.mrb[0].mxu0
          %v736 = vadd.f32 %v551, %v735
          %v737 = vpop.f32.mrb[0].mxu0
          %v738 = vpop.f32.mrb[0].mxu0
          %v739 = vadd.f32 %v550, %v738
          %v740 = vpop.f32.mrb[0].mxu0
          %741 = vmatprep.mubr.bf16.mxu0 0
          %742 = vmatmul.mubr.bf16.gmra.mrb[0].mxu0 %v332
          %v743 = vpop.f32.mrb[0].mxu0
          %v744 = vadd.f32 %v549, %v743
          %v745 = vpop.f32.mrb[0].mxu0
          %v746 = vpop.f32.mrb[0].mxu0
          %v747 = vadd.f32 %v572, %v746
          %v748 = vpop.f32.mrb[0].mxu0
          %749 = vdwg.mxu0
          %s750 = scalar_lea.vmem [#allocation5], 128
          %v751 = vld [vmem:[%s750] sm:$0xf]
          %v752 = vld [vmem:[%s750 + $0x4] sm:$0xf]
          %v753 = vld [vmem:[%s750 + $0x8] sm:$0xf]
          %v754 = vld [vmem:[%s750 + $0xc] sm:$0xf]
          %v755 = vld [vmem:[%s750 + $0x10] sm:$0xf]
          %v756 = vld [vmem:[%s750 + $0x14] sm:$0xf]
          %v757 = vld [vmem:[%s750 + $0x18] sm:$0xf]
          %v758 = vld [vmem:[%s750 + $0x1c] sm:$0xf]
          %v759 = vld [vmem:[%s750 + $0x20] sm:$0xf]
          %v760 = vld [vmem:[%s750 + $0x24] sm:$0xf]
          %v761 = vld [vmem:[%s750 + $0x28] sm:$0xf]
          %v762 = vld [vmem:[%s750 + $0x2c] sm:$0xf]
          %v763 = vld [vmem:[%s750 + $0x30] sm:$0xf]
          %v764 = vld [vmem:[%s750 + $0x34] sm:$0xf]
          %v765 = vld [vmem:[%s750 + $0x38] sm:$0xf]
          %v766 = vld [vmem:[%s750 + $0x3c] sm:$0xf]
          %v783 = vunpack.c.l.b16 %v751
          %v784 = vunpack.c.l.b16 %v752
          %v785 = vunpack.c.l.b16 %v753
          %v786 = vunpack.c.l.b16 %v754
          %v787 = vunpack.c.l.b16 %v755
          %v788 = vunpack.c.l.b16 %v756
          %v789 = vunpack.c.l.b16 %v757
          %v790 = vunpack.c.l.b16 %v758
          %v791 = vunpack.c.l.b16 %v759
          %v792 = vunpack.c.l.b16 %v760
          %v793 = vunpack.c.l.b16 %v761
          %v794 = vunpack.c.l.b16 %v762
          %v795 = vunpack.c.l.b16 %v763
          %v796 = vunpack.c.l.b16 %v764
          %v797 = vunpack.c.l.b16 %v765
          %v798 = vunpack.c.l.b16 %v766
          %v799 = vpack.c.b16 %v784, %v783
          %v800 = vpack.c.b16 %v786, %v785
          %v801 = vpack.c.b16 %v788, %v787
          %v802 = vpack.c.b16 %v790, %v789
          %v803 = vpack.c.b16 %v792, %v791
          %v804 = vpack.c.b16 %v794, %v793
          %v805 = vpack.c.b16 %v796, %v795
          %v806 = vpack.c.b16 %v798, %v797
          %815 = vmatprep.subr.bf16.mxu0 0
          %816 = vmatpush1.bf16.msra.mxu0 %v799
          %817 = vmatprep.subr.bf16.mxu0 0
          %818 = vmatpush1.bf16.msra.mxu0 %v800
          %819 = vmatprep.subr.bf16.mxu0 0
          %820 = vmatpush1.bf16.msra.mxu0 %v801
          %821 = vmatprep.subr.bf16.mxu0 0
          %822 = vmatpush1.bf16.msra.mxu0 %v802
          %823 = vmatprep.subr.bf16.mxu0 0
          %824 = vmatpush1.bf16.msra.mxu0 %v803
          %825 = vmatprep.subr.bf16.mxu0 0
          %826 = vmatpush1.bf16.msra.mxu0 %v804
          %827 = vmatprep.subr.bf16.mxu0 0
          %828 = vmatpush1.bf16.msra.mxu0 %v805
          %829 = vmatprep.subr.bf16.mxu0 0
          %830 = vmatpush1.bf16.msra.mxu0 %v806
          %831 = vmatprep.subr.bf16.mxu0 0
          %832 = vmatpush1.bf16.msra.mxu0 0
          %833 = vmatprep.subr.bf16.mxu0 0
          %834 = vmatpush1.bf16.msra.mxu0 0
          %835 = vmatprep.subr.bf16.mxu0 0
          %836 = vmatpush1.bf16.msra.mxu0 0
          %837 = vmatprep.subr.bf16.mxu0 0
          %838 = vmatpush1.bf16.msra.mxu0 0
          %839 = vmatprep.subr.bf16.mxu0 0
          %840 = vmatpush1.bf16.msra.mxu0 0
          %841 = vmatprep.subr.bf16.mxu0 0
          %842 = vmatpush1.bf16.msra.mxu0 0
          %843 = vmatprep.subr.bf16.mxu0 0
          %844 = vmatpush1.bf16.msra.mxu0 0
          %845 = vmatprep.subr.bf16.mxu0 0
          %846 = vmatpush1.bf16.msra.mxu0 0
          %847 = vmatprep.mubr.bf16.mxu0 0
          %848 = vmatmul.mubr.bf16.gmra.mrb[0].mxu0 %v321
          %v849 = vpop.f32.mrb[0].mxu0
          %v850 = vadd.f32 0.0, %v849
          %v851 = vpop.f32.mrb[0].mxu0
          %v852 = vpop.f32.mrb[0].mxu0
          %v853 = vadd.f32 0.0, %v852
          %v854 = vpop.f32.mrb[0].mxu0
          %855 = vmatprep.mubr.bf16.mxu0 0
          %856 = vmatmul.mubr.bf16.gmra.mrb[0].mxu0 %v322
          %v857 = vpop.f32.mrb[0].mxu0
          %v858 = vadd.f32 0.0, %v857
          %v859 = vpop.f32.mrb[0].mxu0
          %v860 = vpop.f32.mrb[0].mxu0
          %v861 = vadd.f32 0.0, %v860
          %v862 = vpop.f32.mrb[0].mxu0
          %863 = vmatprep.mubr.bf16.mxu0 0
          %864 = vmatmul.mubr.bf16.gmra.mrb[0].mxu0 %v323
          %v865 = vpop.f32.mrb[0].mxu0
          %v866 = vadd.f32 0.0, %v865
          %v867 = vpop.f32.mrb[0].mxu0
          %v868 = vpop.f32.mrb[0].mxu0
          %v869 = vadd.f32 0.0, %v868
          %v870 = vpop.f32.mrb[0].mxu0
          %871 = vmatprep.mubr.bf16.mxu0 0
          %872 = vmatmul.mubr.bf16.gmra.mrb[0].mxu0 %v324
          %v873 = vpop.f32.mrb[0].mxu0
          %v874 = vadd.f32 0.0, %v873
          %v875 = vpop.f32.mrb[0].mxu0
          %v876 = vpop.f32.mrb[0].mxu0
          %v877 = vadd.f32 0.0, %v876
          %v878 = vpop.f32.mrb[0].mxu0
          %879 = vmatprep.mubr.bf16.mxu0 0
          %880 = vmatmul.mubr.bf16.gmra.mrb[0].mxu0 %v325
          %v881 = vpop.f32.mrb[0].mxu0
          %v882 = vadd.f32 0.0, %v881
          %v883 = vpop.f32.mrb[0].mxu0
          %v884 = vpop.f32.mrb[0].mxu0
          %v885 = vadd.f32 0.0, %v884
          %v886 = vpop.f32.mrb[0].mxu0
          %887 = vmatprep.mubr.bf16.mxu0 0
          %888 = vmatmul.mubr.bf16.gmra.mrb[0].mxu0 %v326
          %v889 = vpop.f32.mrb[0].mxu0
          %v890 = vadd.f32 0.0, %v889
          %v891 = vpop.f32.mrb[0].mxu0
          %v892 = vpop.f32.mrb[0].mxu0
          %v893 = vadd.f32 0.0, %v892
          %v894 = vpop.f32.mrb[0].mxu0
          %895 = vmatprep.mubr.bf16.mxu0 0
          %896 = vmatmul.mubr.bf16.gmra.mrb[0].mxu0 %v327
          %v897 = vpop.f32.mrb[0].mxu0
          %v898 = vadd.f32 0.0, %v897
          %v899 = vpop.f32.mrb[0].mxu0
          %v900 = vpop.f32.mrb[0].mxu0
          %v901 = vadd.f32 0.0, %v900
          %v902 = vpop.f32.mrb[0].mxu0
          %903 = vmatprep.mubr.bf16.mxu0 0
          %904 = vmatmul.mubr.bf16.gmra.mrb[0].mxu0 %v328
          %v905 = vpop.f32.mrb[0].mxu0
          %v906 = vadd.f32 0.0, %v905
          %v907 = vpop.f32.mrb[0].mxu0
          %v908 = vpop.f32.mrb[0].mxu0
          %v909 = vadd.f32 0.0, %v908
          %v910 = vpop.f32.mrb[0].mxu0
          %911 = vmatprep.mubr.bf16.mxu0 0
          %912 = vmatmul.mubr.bf16.gmra.mrb[0].mxu0 %v329
          %v913 = vpop.f32.mrb[0].mxu0
          %v914 = vadd.f32 0.0, %v913
          %v915 = vpop.f32.mrb[0].mxu0
          %v916 = vpop.f32.mrb[0].mxu0
          %v917 = vadd.f32 0.0, %v916
          %v918 = vpop.f32.mrb[0].mxu0
          %919 = vmatprep.mubr.bf16.mxu0 0
          %920 = vmatmul.mubr.bf16.gmra.mrb[0].mxu0 %v330
          %v921 = vpop.f32.mrb[0].mxu0
          %v922 = vadd.f32 0.0, %v921
          %v923 = vpop.f32.mrb[0].mxu0
          %v924 = vpop.f32.mrb[0].mxu0
          %v925 = vadd.f32 0.0, %v924
          %v926 = vpop.f32.mrb[0].mxu0
          %927 = vmatprep.mubr.bf16.mxu0 0
          %928 = vmatmul.mubr.bf16.gmra.mrb[0].mxu0 %v331
          %v929 = vpop.f32.mrb[0].mxu0
          %v930 = vadd.f32 0.0, %v929
          %v931 = vpop.f32.mrb[0].mxu0
          %v932 = vpop.f32.mrb[0].mxu0
          %v933 = vadd.f32 0.0, %v932
          %v934 = vpop.f32.mrb[0].mxu0
          %935 = vmatprep.mubr.bf16.mxu0 0
          %936 = vmatmul.mubr.bf16.gmra.mrb[0].mxu0 %v332
          %v937 = vpop.f32.mrb[0].mxu0
          %v938 = vadd.f32 0.0, %v937
          %v939 = vpop.f32.mrb[0].mxu0
          %v940 = vpop.f32.mrb[0].mxu0
          %v941 = vadd.f32 0.0, %v940
          %v942 = vpop.f32.mrb[0].mxu0
          %943 = vdwg.mxu0
          %v944 = vrot.slane %v850, 2
          %v945 = vrot.slane %v853, 2
          %v946 = vrot.slane %v858, 2
          %v947 = vrot.slane %v861, 2
          %v948 = vrot.slane %v866, 2
          %v949 = vrot.slane %v869, 2
          %v950 = vrot.slane %v874, 2
          %v951 = vrot.slane %v877, 2
          %v952 = vrot.slane %v882, 2
          %v953 = vrot.slane %v885, 2
          %v954 = vrot.slane %v890, 2
          %v955 = vrot.slane %v893, 2
          %v956 = vrot.slane %v898, 2
          %v957 = vrot.slane %v901, 2
          %v958 = vrot.slane %v906, 2
          %v959 = vrot.slane %v909, 2
          %v960 = vrot.slane %v914, 2
          %v961 = vrot.slane %v917, 2
          %v962 = vrot.slane %v922, 2
          %v963 = vrot.slane %v925, 2
          %v964 = vrot.slane %v930, 2
          %v965 = vrot.slane %v933, 2
          %v966 = vrot.slane %v938, 2
          %v967 = vrot.slane %v941, 2
          %vm968 = vcmp.lt.s32.totalorder %v547, 6
          %v969 = vsel %vm968, %v966, %v967
          %v970 = vsel %vm968, %v965, %v966
          %v971 = vsel %vm968, %v964, %v965
          %v972 = vsel %vm968, %v963, %v964
          %v973 = vsel %vm968, %v962, %v963
          %v974 = vsel %vm968, %v961, %v962
          %v975 = vsel %vm968, %v960, %v961
          %v976 = vsel %vm968, %v959, %v960
          %v977 = vsel %vm968, %v958, %v959
          %v978 = vsel %vm968, %v957, %v958
          %v979 = vsel %vm968, %v956, %v957
          %v980 = vsel %vm968, %v955, %v956
          %v981 = vsel %vm968, %v954, %v955
          %v982 = vsel %vm968, %v953, %v954
          %v983 = vsel %vm968, %v952, %v953
          %v984 = vsel %vm968, %v951, %v952
          %v985 = vsel %vm968, %v950, %v951
          %v986 = vsel %vm968, %v949, %v950
          %v987 = vsel %vm968, %v948, %v949
          %v988 = vsel %vm968, %v947, %v948
          %v989 = vsel %vm968, %v946, %v947
          %v990 = vsel %vm968, %v945, %v946
          %v991 = vsel %vm968, %v944, %v945
          %v992 = vsel %vm968, %v967, %v944
          %v993 = vadd.f32 %v656, %v991
          %v994 = vadd.f32 %v659, %v990
          %v995 = vadd.f32 %v664, %v989
          %v996 = vadd.f32 %v667, %v988
          %v997 = vadd.f32 %v672, %v987
          %v998 = vadd.f32 %v675, %v986
          %v999 = vadd.f32 %v680, %v985
          %v1000 = vadd.f32 %v683, %v984
          %v1001 = vadd.f32 %v688, %v983
          %v1002 = vadd.f32 %v691, %v982
          %v1003 = vadd.f32 %v696, %v981
          %v1004 = vadd.f32 %v699, %v980
          %v1005 = vadd.f32 %v704, %v979
          %v1006 = vadd.f32 %v707, %v978
          %v1007 = vadd.f32 %v712, %v977
          %v1008 = vadd.f32 %v715, %v976
          %v1009 = vadd.f32 %v720, %v975
          %v1010 = vadd.f32 %v723, %v974
          %v1011 = vadd.f32 %v728, %v973
          %v1012 = vadd.f32 %v731, %v972
          %v1013 = vadd.f32 %v736, %v971
          %v1014 = vadd.f32 %v739, %v970
          %v1015 = vadd.f32 %v744, %v969
          %v1016 = vadd.f32 %v747, %v992
          %s1017 = sadd.s32 %s212, 1
          %s1018 = smul.u32 %s1017, 3
          %s1019 = smul.addr %s1018, 4
          %s1020 = scalar_lea.vmem %s177, %s1019 [#allocation2]
          %v1021 = vld [vmem:[%s1020] sm:$0xf]
          %v1022 = vld [vmem:[%s1020 + $0x4] sm:$0xf]
          %v1023 = vld [vmem:[%s1020 + $0x8] sm:$0xf]
          %v1024 = vld [vmem:[%s1020 + $0xc] sm:$0xf]
          %v1025 = vld [vmem:[%s1020 + $0x10] sm:$0xf]
          %v1026 = vld [vmem:[%s1020 + $0x14] sm:$0xf]
          %v1027 = vld [vmem:[%s1020 + $0x18] sm:$0xf]
          %v1028 = vld [vmem:[%s1020 + $0x1c] sm:$0xf]
          %v1029 = vld [vmem:[%s1020 + $0x20] sm:$0xf]
          %v1030 = vld [vmem:[%s1020 + $0x24] sm:$0xf]
          %v1031 = vld [vmem:[%s1020 + $0x28] sm:$0xf]
          %v1032 = vld [vmem:[%s1020 + $0x2c] sm:$0xf]
          %v1033 = vld [vmem:[%s1020 + $0x30] sm:$0xf]
          %v1034 = vld [vmem:[%s1020 + $0x34] sm:$0xf]
          %v1035 = vld [vmem:[%s1020 + $0x38] sm:$0xf]
          %v1036 = vld [vmem:[%s1020 + $0x3c] sm:$0xf]
          %v1037 = vld [vmem:[%s1020 + $0x40] sm:$0xf]
          %v1038 = vld [vmem:[%s1020 + $0x44] sm:$0xf]
          %v1039 = vld [vmem:[%s1020 + $0x48] sm:$0xf]
          %v1040 = vld [vmem:[%s1020 + $0x4c] sm:$0xf]
          %v1041 = vld [vmem:[%s1020 + $0x50] sm:$0xf]
          %v1042 = vld [vmem:[%s1020 + $0x54] sm:$0xf]
          %v1043 = vld [vmem:[%s1020 + $0x58] sm:$0xf]
          %v1044 = vld [vmem:[%s1020 + $0x5c] sm:$0xf]
          %s1045 = scalar_lea.vmem [#allocation5], 192
          %v1046 = vld [vmem:[%s1045] sm:$0xf]
          %v1047 = vld [vmem:[%s1045 + $0x4] sm:$0xf]
          %v1048 = vld [vmem:[%s1045 + $0x8] sm:$0xf]
          %v1049 = vld [vmem:[%s1045 + $0xc] sm:$0xf]
          %v1050 = vld [vmem:[%s1045 + $0x10] sm:$0xf]
          %v1051 = vld [vmem:[%s1045 + $0x14] sm:$0xf]
          %v1052 = vld [vmem:[%s1045 + $0x18] sm:$0xf]
          %v1053 = vld [vmem:[%s1045 + $0x1c] sm:$0xf]
          %v1054 = vld [vmem:[%s1045 + $0x20] sm:$0xf]
          %v1055 = vld [vmem:[%s1045 + $0x24] sm:$0xf]
          %v1056 = vld [vmem:[%s1045 + $0x28] sm:$0xf]
          %v1057 = vld [vmem:[%s1045 + $0x2c] sm:$0xf]
          %v1058 = vld [vmem:[%s1045 + $0x30] sm:$0xf]
          %v1059 = vld [vmem:[%s1045 + $0x34] sm:$0xf]
          %v1060 = vld [vmem:[%s1045 + $0x38] sm:$0xf]
          %v1061 = vld [vmem:[%s1045 + $0x3c] sm:$0xf]
          %v1086 = vunpack.c.l.b16 %v1021
          %v1087 = vunpack.c.l.b16 %v1022
          %v1088 = vunpack.c.l.b16 %v1023
          %v1089 = vunpack.c.l.b16 %v1024
          %v1090 = vunpack.c.l.b16 %v1025
          %v1091 = vunpack.c.l.b16 %v1026
          %v1092 = vunpack.c.l.b16 %v1027
          %v1093 = vunpack.c.l.b16 %v1028
          %v1094 = vunpack.c.l.b16 %v1029
          %v1095 = vunpack.c.l.b16 %v1030
          %v1096 = vunpack.c.l.b16 %v1031
          %v1097 = vunpack.c.l.b16 %v1032
          %v1098 = vunpack.c.l.b16 %v1033
          %v1099 = vunpack.c.l.b16 %v1034
          %v1100 = vunpack.c.l.b16 %v1035
          %v1101 = vunpack.c.l.b16 %v1036
          %v1102 = vunpack.c.l.b16 %v1037
          %v1103 = vunpack.c.l.b16 %v1038
          %v1104 = vunpack.c.l.b16 %v1039
          %v1105 = vunpack.c.l.b16 %v1040
          %v1106 = vunpack.c.l.b16 %v1041
          %v1107 = vunpack.c.l.b16 %v1042
          %v1108 = vunpack.c.l.b16 %v1043
          %v1109 = vunpack.c.l.b16 %v1044
          %v1110 = vpack.c.b16 %v1087, %v1086
          %v1111 = vpack.c.b16 %v1089, %v1088
          %v1112 = vpack.c.b16 %v1091, %v1090
          %v1113 = vpack.c.b16 %v1093, %v1092
          %v1114 = vpack.c.b16 %v1095, %v1094
          %v1115 = vpack.c.b16 %v1097, %v1096
          %v1116 = vpack.c.b16 %v1099, %v1098
          %v1117 = vpack.c.b16 %v1101, %v1100
          %v1118 = vpack.c.b16 %v1103, %v1102
          %v1119 = vpack.c.b16 %v1105, %v1104
          %v1120 = vpack.c.b16 %v1107, %v1106
          %v1121 = vpack.c.b16 %v1109, %v1108
          %v1150 = vunpack.c.l.b16 %v1046
          %v1151 = vunpack.c.l.b16 %v1047
          %v1152 = vunpack.c.l.b16 %v1048
          %v1153 = vunpack.c.l.b16 %v1049
          %v1154 = vunpack.c.l.b16 %v1050
          %v1155 = vunpack.c.l.b16 %v1051
          %v1156 = vunpack.c.l.b16 %v1052
          %v1157 = vunpack.c.l.b16 %v1053
          %v1158 = vunpack.c.l.b16 %v1054
          %v1159 = vunpack.c.l.b16 %v1055
          %v1160 = vunpack.c.l.b16 %v1056
          %v1161 = vunpack.c.l.b16 %v1057
          %v1162 = vunpack.c.l.b16 %v1058
          %v1163 = vunpack.c.l.b16 %v1059
          %v1164 = vunpack.c.l.b16 %v1060
          %v1165 = vunpack.c.l.b16 %v1061
          %v1166 = vpack.c.b16 %v1151, %v1150
          %v1167 = vpack.c.b16 %v1153, %v1152
          %v1168 = vpack.c.b16 %v1155, %v1154
          %v1169 = vpack.c.b16 %v1157, %v1156
          %v1170 = vpack.c.b16 %v1159, %v1158
          %v1171 = vpack.c.b16 %v1161, %v1160
          %v1172 = vpack.c.b16 %v1163, %v1162
          %v1173 = vpack.c.b16 %v1165, %v1164
          %1182 = vmatprep.subr.bf16.mxu0 0
          %1183 = vmatpush1.bf16.msra.mxu0 %v1166
          %1184 = vmatprep.subr.bf16.mxu0 0
          %1185 = vmatpush1.bf16.msra.mxu0 %v1167
          %1186 = vmatprep.subr.bf16.mxu0 0
          %1187 = vmatpush1.bf16.msra.mxu0 %v1168
          %1188 = vmatprep.subr.bf16.mxu0 0
          %1189 = vmatpush1.bf16.msra.mxu0 %v1169
          %1190 = vmatprep.subr.bf16.mxu0 0
          %1191 = vmatpush1.bf16.msra.mxu0 %v1170
          %1192 = vmatprep.subr.bf16.mxu0 0
          %1193 = vmatpush1.bf16.msra.mxu0 %v1171
          %1194 = vmatprep.subr.bf16.mxu0 0
          %1195 = vmatpush1.bf16.msra.mxu0 %v1172
          %1196 = vmatprep.subr.bf16.mxu0 0
          %1197 = vmatpush1.bf16.msra.mxu0 %v1173
          %1198 = vmatprep.subr.bf16.mxu0 0
          %1199 = vmatpush1.bf16.msra.mxu0 0
          %1200 = vmatprep.subr.bf16.mxu0 0
          %1201 = vmatpush1.bf16.msra.mxu0 0
          %1202 = vmatprep.subr.bf16.mxu0 0
          %1203 = vmatpush1.bf16.msra.mxu0 0
          %1204 = vmatprep.subr.bf16.mxu0 0
          %1205 = vmatpush1.bf16.msra.mxu0 0
          %1206 = vmatprep.subr.bf16.mxu0 0
          %1207 = vmatpush1.bf16.msra.mxu0 0
          %1208 = vmatprep.subr.bf16.mxu0 0
          %1209 = vmatpush1.bf16.msra.mxu0 0
          %1210 = vmatprep.subr.bf16.mxu0 0
          %1211 = vmatpush1.bf16.msra.mxu0 0
          %1212 = vmatprep.subr.bf16.mxu0 0
          %1213 = vmatpush1.bf16.msra.mxu0 0
          %1214 = vmatprep.mubr.bf16.mxu0 0
          %1215 = vmatmul.mubr.bf16.gmra.mrb[0].mxu0 %v1110
          %v1216 = vpop.f32.mrb[0].mxu0
          %v1217 = vadd.f32 0.0, %v1216
          %v1218 = vpop.f32.mrb[0].mxu0
          %v1219 = vpop.f32.mrb[0].mxu0
          %v1220 = vadd.f32 0.0, %v1219
          %v1221 = vpop.f32.mrb[0].mxu0
          %1222 = vmatprep.mubr.bf16.mxu0 0
          %1223 = vmatmul.mubr.bf16.gmra.mrb[0].mxu0 %v1111
          %v1224 = vpop.f32.mrb[0].mxu0
          %v1225 = vadd.f32 0.0, %v1224
          %v1226 = vpop.f32.mrb[0].mxu0
          %v1227 = vpop.f32.mrb[0].mxu0
          %v1228 = vadd.f32 0.0, %v1227
          %v1229 = vpop.f32.mrb[0].mxu0
          %1230 = vmatprep.mubr.bf16.mxu0 0
          %1231 = vmatmul.mubr.bf16.gmra.mrb[0].mxu0 %v1112
          %v1232 = vpop.f32.mrb[0].mxu0
          %v1233 = vadd.f32 0.0, %v1232
          %v1234 = vpop.f32.mrb[0].mxu0
          %v1235 = vpop.f32.mrb[0].mxu0
          %v1236 = vadd.f32 0.0, %v1235
          %v1237 = vpop.f32.mrb[0].mxu0
          %1238 = vmatprep.mubr.bf16.mxu0 0
          %1239 = vmatmul.mubr.bf16.gmra.mrb[0].mxu0 %v1113
          %v1240 = vpop.f32.mrb[0].mxu0
          %v1241 = vadd.f32 0.0, %v1240
          %v1242 = vpop.f32.mrb[0].mxu0
          %v1243 = vpop.f32.mrb[0].mxu0
          %v1244 = vadd.f32 0.0, %v1243
          %v1245 = vpop.f32.mrb[0].mxu0
          %1246 = vmatprep.mubr.bf16.mxu0 0
          %1247 = vmatmul.mubr.bf16.gmra.mrb[0].mxu0 %v1114
          %v1248 = vpop.f32.mrb[0].mxu0
          %v1249 = vadd.f32 0.0, %v1248
          %v1250 = vpop.f32.mrb[0].mxu0
          %v1251 = vpop.f32.mrb[0].mxu0
          %v1252 = vadd.f32 0.0, %v1251
          %v1253 = vpop.f32.mrb[0].mxu0
          %1254 = vmatprep.mubr.bf16.mxu0 0
          %1255 = vmatmul.mubr.bf16.gmra.mrb[0].mxu0 %v1115
          %v1256 = vpop.f32.mrb[0].mxu0
          %v1257 = vadd.f32 0.0, %v1256
          %v1258 = vpop.f32.mrb[0].mxu0
          %v1259 = vpop.f32.mrb[0].mxu0
          %v1260 = vadd.f32 0.0, %v1259
          %v1261 = vpop.f32.mrb[0].mxu0
          %1262 = vmatprep.mubr.bf16.mxu0 0
          %1263 = vmatmul.mubr.bf16.gmra.mrb[0].mxu0 %v1116
          %v1264 = vpop.f32.mrb[0].mxu0
          %v1265 = vadd.f32 0.0, %v1264
          %v1266 = vpop.f32.mrb[0].mxu0
          %v1267 = vpop.f32.mrb[0].mxu0
          %v1268 = vadd.f32 0.0, %v1267
          %v1269 = vpop.f32.mrb[0].mxu0
          %1270 = vmatprep.mubr.bf16.mxu0 0
          %1271 = vmatmul.mubr.bf16.gmra.mrb[0].mxu0 %v1117
          %v1272 = vpop.f32.mrb[0].mxu0
          %v1273 = vadd.f32 0.0, %v1272
          %v1274 = vpop.f32.mrb[0].mxu0
          %v1275 = vpop.f32.mrb[0].mxu0
          %v1276 = vadd.f32 0.0, %v1275
          %v1277 = vpop.f32.mrb[0].mxu0
          %1278 = vmatprep.mubr.bf16.mxu0 0
          %1279 = vmatmul.mubr.bf16.gmra.mrb[0].mxu0 %v1118
          %v1280 = vpop.f32.mrb[0].mxu0
          %v1281 = vadd.f32 0.0, %v1280
          %v1282 = vpop.f32.mrb[0].mxu0
          %v1283 = vpop.f32.mrb[0].mxu0
          %v1284 = vadd.f32 0.0, %v1283
          %v1285 = vpop.f32.mrb[0].mxu0
          %1286 = vmatprep.mubr.bf16.mxu0 0
          %1287 = vmatmul.mubr.bf16.gmra.mrb[0].mxu0 %v1119
          %v1288 = vpop.f32.mrb[0].mxu0
          %v1289 = vadd.f32 0.0, %v1288
          %v1290 = vpop.f32.mrb[0].mxu0
          %v1291 = vpop.f32.mrb[0].mxu0
          %v1292 = vadd.f32 0.0, %v1291
          %v1293 = vpop.f32.mrb[0].mxu0
          %1294 = vmatprep.mubr.bf16.mxu0 0
          %1295 = vmatmul.mubr.bf16.gmra.mrb[0].mxu0 %v1120
          %v1296 = vpop.f32.mrb[0].mxu0
          %v1297 = vadd.f32 0.0, %v1296
          %v1298 = vpop.f32.mrb[0].mxu0
          %v1299 = vpop.f32.mrb[0].mxu0
          %v1300 = vadd.f32 0.0, %v1299
          %v1301 = vpop.f32.mrb[0].mxu0
          %1302 = vmatprep.mubr.bf16.mxu0 0
          %1303 = vmatmul.mubr.bf16.gmra.mrb[0].mxu0 %v1121
          %v1304 = vpop.f32.mrb[0].mxu0
          %v1305 = vadd.f32 0.0, %v1304
          %v1306 = vpop.f32.mrb[0].mxu0
          %v1307 = vpop.f32.mrb[0].mxu0
          %v1308 = vadd.f32 0.0, %v1307
          %v1309 = vpop.f32.mrb[0].mxu0
          %1310 = vdwg.mxu0
          %v1311 = vadd.f32 %v993, %v1217
          %v1312 = vadd.f32 %v994, %v1220
          %v1313 = vadd.f32 %v995, %v1225
          %v1314 = vadd.f32 %v996, %v1228
          %v1315 = vadd.f32 %v997, %v1233
          %v1316 = vadd.f32 %v998, %v1236
          %v1317 = vadd.f32 %v999, %v1241
          %v1318 = vadd.f32 %v1000, %v1244
          %v1319 = vadd.f32 %v1001, %v1249
          %v1320 = vadd.f32 %v1002, %v1252
          %v1321 = vadd.f32 %v1003, %v1257
          %v1322 = vadd.f32 %v1004, %v1260
          %v1323 = vadd.f32 %v1005, %v1265
          %v1324 = vadd.f32 %v1006, %v1268
          %v1325 = vadd.f32 %v1007, %v1273
          %v1326 = vadd.f32 %v1008, %v1276
          %v1327 = vadd.f32 %v1009, %v1281
          %v1328 = vadd.f32 %v1010, %v1284
          %v1329 = vadd.f32 %v1011, %v1289
          %v1330 = vadd.f32 %v1012, %v1292
          %v1331 = vadd.f32 %v1013, %v1297
          %v1332 = vadd.f32 %v1014, %v1300
          %v1333 = vadd.f32 %v1015, %v1305
          %v1334 = vadd.f32 %v1016, %v1308
          %s1335 = scalar_lea.vmem [#allocation5], 256
          %v1336 = vld [vmem:[%s1335] sm:$0xf]
          %v1337 = vld [vmem:[%s1335 + $0x4] sm:$0xf]
          %v1338 = vld [vmem:[%s1335 + $0x8] sm:$0xf]
          %v1339 = vld [vmem:[%s1335 + $0xc] sm:$0xf]
          %v1340 = vld [vmem:[%s1335 + $0x10] sm:$0xf]
          %v1341 = vld [vmem:[%s1335 + $0x14] sm:$0xf]
          %v1342 = vld [vmem:[%s1335 + $0x18] sm:$0xf]
          %v1343 = vld [vmem:[%s1335 + $0x1c] sm:$0xf]
          %v1344 = vld [vmem:[%s1335 + $0x20] sm:$0xf]
          %v1345 = vld [vmem:[%s1335 + $0x24] sm:$0xf]
          %v1346 = vld [vmem:[%s1335 + $0x28] sm:$0xf]
          %v1347 = vld [vmem:[%s1335 + $0x2c] sm:$0xf]
          %v1348 = vld [vmem:[%s1335 + $0x30] sm:$0xf]
          %v1349 = vld [vmem:[%s1335 + $0x34] sm:$0xf]
          %v1350 = vld [vmem:[%s1335 + $0x38] sm:$0xf]
          %v1351 = vld [vmem:[%s1335 + $0x3c] sm:$0xf]
          %v1368 = vunpack.c.l.b16 %v1336
          %v1369 = vunpack.c.l.b16 %v1337
          %v1370 = vunpack.c.l.b16 %v1338
          %v1371 = vunpack.c.l.b16 %v1339
          %v1372 = vunpack.c.l.b16 %v1340
          %v1373 = vunpack.c.l.b16 %v1341
          %v1374 = vunpack.c.l.b16 %v1342
          %v1375 = vunpack.c.l.b16 %v1343
          %v1376 = vunpack.c.l.b16 %v1344
          %v1377 = vunpack.c.l.b16 %v1345
          %v1378 = vunpack.c.l.b16 %v1346
          %v1379 = vunpack.c.l.b16 %v1347
          %v1380 = vunpack.c.l.b16 %v1348
          %v1381 = vunpack.c.l.b16 %v1349
          %v1382 = vunpack.c.l.b16 %v1350
          %v1383 = vunpack.c.l.b16 %v1351
          %v1384 = vpack.c.b16 %v1369, %v1368
          %v1385 = vpack.c.b16 %v1371, %v1370
          %v1386 = vpack.c.b16 %v1373, %v1372
          %v1387 = vpack.c.b16 %v1375, %v1374
          %v1388 = vpack.c.b16 %v1377, %v1376
          %v1389 = vpack.c.b16 %v1379, %v1378
          %v1390 = vpack.c.b16 %v1381, %v1380
          %v1391 = vpack.c.b16 %v1383, %v1382
          %1400 = vmatprep.subr.bf16.mxu0 0
          %1401 = vmatpush1.bf16.msra.mxu0 %v1384
          %1402 = vmatprep.subr.bf16.mxu0 0
          %1403 = vmatpush1.bf16.msra.mxu0 %v1385
          %1404 = vmatprep.subr.bf16.mxu0 0
          %1405 = vmatpush1.bf16.msra.mxu0 %v1386
          %1406 = vmatprep.subr.bf16.mxu0 0
          %1407 = vmatpush1.bf16.msra.mxu0 %v1387
          %1408 = vmatprep.subr.bf16.mxu0 0
          %1409 = vmatpush1.bf16.msra.mxu0 %v1388
          %1410 = vmatprep.subr.bf16.mxu0 0
          %1411 = vmatpush1.bf16.msra.mxu0 %v1389
          %1412 = vmatprep.subr.bf16.mxu0 0
          %1413 = vmatpush1.bf16.msra.mxu0 %v1390
          %1414 = vmatprep.subr.bf16.mxu0 0
          %1415 = vmatpush1.bf16.msra.mxu0 %v1391
          %1416 = vmatprep.subr.bf16.mxu0 0
          %1417 = vmatpush1.bf16.msra.mxu0 0
          %1418 = vmatprep.subr.bf16.mxu0 0
          %1419 = vmatpush1.bf16.msra.mxu0 0
          %1420 = vmatprep.subr.bf16.mxu0 0
          %1421 = vmatpush1.bf16.msra.mxu0 0
          %1422 = vmatprep.subr.bf16.mxu0 0
          %1423 = vmatpush1.bf16.msra.mxu0 0
          %1424 = vmatprep.subr.bf16.mxu0 0
          %1425 = vmatpush1.bf16.msra.mxu0 0
          %1426 = vmatprep.subr.bf16.mxu0 0
          %1427 = vmatpush1.bf16.msra.mxu0 0
          %1428 = vmatprep.subr.bf16.mxu0 0
          %1429 = vmatpush1.bf16.msra.mxu0 0
          %1430 = vmatprep.subr.bf16.mxu0 0
          %1431 = vmatpush1.bf16.msra.mxu0 0
          %1432 = vmatprep.mubr.bf16.mxu0 0
          %1433 = vmatmul.mubr.bf16.gmra.mrb[0].mxu0 %v1110
          %v1434 = vpop.f32.mrb[0].mxu0
          %v1435 = vadd.f32 0.0, %v1434
          %v1436 = vpop.f32.mrb[0].mxu0
          %v1437 = vpop.f32.mrb[0].mxu0
          %v1438 = vadd.f32 0.0, %v1437
          %v1439 = vpop.f32.mrb[0].mxu0
          %1440 = vmatprep.mubr.bf16.mxu0 0
          %1441 = vmatmul.mubr.bf16.gmra.mrb[0].mxu0 %v1111
          %v1442 = vpop.f32.mrb[0].mxu0
          %v1443 = vadd.f32 0.0, %v1442
          %v1444 = vpop.f32.mrb[0].mxu0
          %v1445 = vpop.f32.mrb[0].mxu0
          %v1446 = vadd.f32 0.0, %v1445
          %v1447 = vpop.f32.mrb[0].mxu0
          %1448 = vmatprep.mubr.bf16.mxu0 0
          %1449 = vmatmul.mubr.bf16.gmra.mrb[0].mxu0 %v1112
          %v1450 = vpop.f32.mrb[0].mxu0
          %v1451 = vadd.f32 0.0, %v1450
          %v1452 = vpop.f32.mrb[0].mxu0
          %v1453 = vpop.f32.mrb[0].mxu0
          %v1454 = vadd.f32 0.0, %v1453
          %v1455 = vpop.f32.mrb[0].mxu0
          %1456 = vmatprep.mubr.bf16.mxu0 0
          %1457 = vmatmul.mubr.bf16.gmra.mrb[0].mxu0 %v1113
          %v1458 = vpop.f32.mrb[0].mxu0
          %v1459 = vadd.f32 0.0, %v1458
          %v1460 = vpop.f32.mrb[0].mxu0
          %v1461 = vpop.f32.mrb[0].mxu0
          %v1462 = vadd.f32 0.0, %v1461
          %v1463 = vpop.f32.mrb[0].mxu0
          %1464 = vmatprep.mubr.bf16.mxu0 0
          %1465 = vmatmul.mubr.bf16.gmra.mrb[0].mxu0 %v1114
          %v1466 = vpop.f32.mrb[0].mxu0
          %v1467 = vadd.f32 0.0, %v1466
          %v1468 = vpop.f32.mrb[0].mxu0
          %v1469 = vpop.f32.mrb[0].mxu0
          %v1470 = vadd.f32 0.0, %v1469
          %v1471 = vpop.f32.mrb[0].mxu0
          %1472 = vmatprep.mubr.bf16.mxu0 0
          %1473 = vmatmul.mubr.bf16.gmra.mrb[0].mxu0 %v1115
          %v1474 = vpop.f32.mrb[0].mxu0
          %v1475 = vadd.f32 0.0, %v1474
          %v1476 = vpop.f32.mrb[0].mxu0
          %v1477 = vpop.f32.mrb[0].mxu0
          %v1478 = vadd.f32 0.0, %v1477
          %v1479 = vpop.f32.mrb[0].mxu0
          %1480 = vmatprep.mubr.bf16.mxu0 0
          %1481 = vmatmul.mubr.bf16.gmra.mrb[0].mxu0 %v1116
          %v1482 = vpop.f32.mrb[0].mxu0
          %v1483 = vadd.f32 0.0, %v1482
          %v1484 = vpop.f32.mrb[0].mxu0
          %v1485 = vpop.f32.mrb[0].mxu0
          %v1486 = vadd.f32 0.0, %v1485
          %v1487 = vpop.f32.mrb[0].mxu0
          %1488 = vmatprep.mubr.bf16.mxu0 0
          %1489 = vmatmul.mubr.bf16.gmra.mrb[0].mxu0 %v1117
          %v1490 = vpop.f32.mrb[0].mxu0
          %v1491 = vadd.f32 0.0, %v1490
          %v1492 = vpop.f32.mrb[0].mxu0
          %v1493 = vpop.f32.mrb[0].mxu0
          %v1494 = vadd.f32 0.0, %v1493
          %v1495 = vpop.f32.mrb[0].mxu0
          %1496 = vmatprep.mubr.bf16.mxu0 0
          %1497 = vmatmul.mubr.bf16.gmra.mrb[0].mxu0 %v1118
          %v1498 = vpop.f32.mrb[0].mxu0
          %v1499 = vadd.f32 0.0, %v1498
          %v1500 = vpop.f32.mrb[0].mxu0
          %v1501 = vpop.f32.mrb[0].mxu0
          %v1502 = vadd.f32 0.0, %v1501
          %v1503 = vpop.f32.mrb[0].mxu0
          %1504 = vmatprep.mubr.bf16.mxu0 0
          %1505 = vmatmul.mubr.bf16.gmra.mrb[0].mxu0 %v1119
          %v1506 = vpop.f32.mrb[0].mxu0
          %v1507 = vadd.f32 0.0, %v1506
          %v1508 = vpop.f32.mrb[0].mxu0
          %v1509 = vpop.f32.mrb[0].mxu0
          %v1510 = vadd.f32 0.0, %v1509
          %v1511 = vpop.f32.mrb[0].mxu0
          %1512 = vmatprep.mubr.bf16.mxu0 0
          %1513 = vmatmul.mubr.bf16.gmra.mrb[0].mxu0 %v1120
          %v1514 = vpop.f32.mrb[0].mxu0
          %v1515 = vadd.f32 0.0, %v1514
          %v1516 = vpop.f32.mrb[0].mxu0
          %v1517 = vpop.f32.mrb[0].mxu0
          %v1518 = vadd.f32 0.0, %v1517
          %v1519 = vpop.f32.mrb[0].mxu0
          %1520 = vmatprep.mubr.bf16.mxu0 0
          %1521 = vmatmul.mubr.bf16.gmra.mrb[0].mxu0 %v1121
          %v1522 = vpop.f32.mrb[0].mxu0
          %v1523 = vadd.f32 0.0, %v1522
          %v1524 = vpop.f32.mrb[0].mxu0
          %v1525 = vpop.f32.mrb[0].mxu0
          %v1526 = vadd.f32 0.0, %v1525
          %v1527 = vpop.f32.mrb[0].mxu0
          %1528 = vdwg.mxu0
          %v1529 = vrot.slane %v1435, 1
          %v1530 = vrot.slane %v1438, 1
          %v1531 = vrot.slane %v1443, 1
          %v1532 = vrot.slane %v1446, 1
          %v1533 = vrot.slane %v1451, 1
          %v1534 = vrot.slane %v1454, 1
          %v1535 = vrot.slane %v1459, 1
          %v1536 = vrot.slane %v1462, 1
          %v1537 = vrot.slane %v1467, 1
          %v1538 = vrot.slane %v1470, 1
          %v1539 = vrot.slane %v1475, 1
          %v1540 = vrot.slane %v1478, 1
          %v1541 = vrot.slane %v1483, 1
          %v1542 = vrot.slane %v1486, 1
          %v1543 = vrot.slane %v1491, 1
          %v1544 = vrot.slane %v1494, 1
          %v1545 = vrot.slane %v1499, 1
          %v1546 = vrot.slane %v1502, 1
          %v1547 = vrot.slane %v1507, 1
          %v1548 = vrot.slane %v1510, 1
          %v1549 = vrot.slane %v1515, 1
          %v1550 = vrot.slane %v1518, 1
          %v1551 = vrot.slane %v1523, 1
          %v1552 = vrot.slane %v1526, 1
          %v1553 = vsel %vm548, %v1551, %v1552
          %v1554 = vsel %vm548, %v1550, %v1551
          %v1555 = vsel %vm548, %v1549, %v1550
          %v1556 = vsel %vm548, %v1548, %v1549
          %v1557 = vsel %vm548, %v1547, %v1548
          %v1558 = vsel %vm548, %v1546, %v1547
          %v1559 = vsel %vm548, %v1545, %v1546
          %v1560 = vsel %vm548, %v1544, %v1545
          %v1561 = vsel %vm548, %v1543, %v1544
          %v1562 = vsel %vm548, %v1542, %v1543
          %v1563 = vsel %vm548, %v1541, %v1542
          %v1564 = vsel %vm548, %v1540, %v1541
          %v1565 = vsel %vm548, %v1539, %v1540
          %v1566 = vsel %vm548, %v1538, %v1539
          %v1567 = vsel %vm548, %v1537, %v1538
          %v1568 = vsel %vm548, %v1536, %v1537
          %v1569 = vsel %vm548, %v1535, %v1536
          %v1570 = vsel %vm548, %v1534, %v1535
          %v1571 = vsel %vm548, %v1533, %v1534
          %v1572 = vsel %vm548, %v1532, %v1533
          %v1573 = vsel %vm548, %v1531, %v1532
          %v1574 = vsel %vm548, %v1530, %v1531
          %v1575 = vsel %vm548, %v1529, %v1530
          %v1576 = vsel %vm548, %v1552, %v1529
          %v1577 = vadd.f32 %v1311, %v1575
          %v1578 = vadd.f32 %v1312, %v1574
          %v1579 = vadd.f32 %v1313, %v1573
          %v1580 = vadd.f32 %v1314, %v1572
          %v1581 = vadd.f32 %v1315, %v1571
          %v1582 = vadd.f32 %v1316, %v1570
          %v1583 = vadd.f32 %v1317, %v1569
          %v1584 = vadd.f32 %v1318, %v1568
          %v1585 = vadd.f32 %v1319, %v1567
          %v1586 = vadd.f32 %v1320, %v1566
          %v1587 = vadd.f32 %v1321, %v1565
          %v1588 = vadd.f32 %v1322, %v1564
          %v1589 = vadd.f32 %v1323, %v1563
          %v1590 = vadd.f32 %v1324, %v1562
          %v1591 = vadd.f32 %v1325, %v1561
          %v1592 = vadd.f32 %v1326, %v1560
          %v1593 = vadd.f32 %v1327, %v1559
          %v1594 = vadd.f32 %v1328, %v1558
          %v1595 = vadd.f32 %v1329, %v1557
          %v1596 = vadd.f32 %v1330, %v1556
          %v1597 = vadd.f32 %v1331, %v1555
          %v1598 = vadd.f32 %v1332, %v1554
          %v1599 = vadd.f32 %v1333, %v1553
          %v1600 = vadd.f32 %v1334, %v1576
          %s1601 = scalar_lea.vmem [#allocation5], 320
          %v1602 = vld [vmem:[%s1601] sm:$0xf]
          %v1603 = vld [vmem:[%s1601 + $0x4] sm:$0xf]
          %v1604 = vld [vmem:[%s1601 + $0x8] sm:$0xf]
          %v1605 = vld [vmem:[%s1601 + $0xc] sm:$0xf]
          %v1606 = vld [vmem:[%s1601 + $0x10] sm:$0xf]
          %v1607 = vld [vmem:[%s1601 + $0x14] sm:$0xf]
          %v1608 = vld [vmem:[%s1601 + $0x18] sm:$0xf]
          %v1609 = vld [vmem:[%s1601 + $0x1c] sm:$0xf]
          %v1610 = vld [vmem:[%s1601 + $0x20] sm:$0xf]
          %v1611 = vld [vmem:[%s1601 + $0x24] sm:$0xf]
          %v1612 = vld [vmem:[%s1601 + $0x28] sm:$0xf]
          %v1613 = vld [vmem:[%s1601 + $0x2c] sm:$0xf]
          %v1614 = vld [vmem:[%s1601 + $0x30] sm:$0xf]
          %v1615 = vld [vmem:[%s1601 + $0x34] sm:$0xf]
          %v1616 = vld [vmem:[%s1601 + $0x38] sm:$0xf]
          %v1617 = vld [vmem:[%s1601 + $0x3c] sm:$0xf]
          %v1634 = vunpack.c.l.b16 %v1602
          %v1635 = vunpack.c.l.b16 %v1603
          %v1636 = vunpack.c.l.b16 %v1604
          %v1637 = vunpack.c.l.b16 %v1605
          %v1638 = vunpack.c.l.b16 %v1606
          %v1639 = vunpack.c.l.b16 %v1607
          %v1640 = vunpack.c.l.b16 %v1608
          %v1641 = vunpack.c.l.b16 %v1609
          %v1642 = vunpack.c.l.b16 %v1610
          %v1643 = vunpack.c.l.b16 %v1611
          %v1644 = vunpack.c.l.b16 %v1612
          %v1645 = vunpack.c.l.b16 %v1613
          %v1646 = vunpack.c.l.b16 %v1614
          %v1647 = vunpack.c.l.b16 %v1615
          %v1648 = vunpack.c.l.b16 %v1616
          %v1649 = vunpack.c.l.b16 %v1617
          %v1650 = vpack.c.b16 %v1635, %v1634
          %v1651 = vpack.c.b16 %v1637, %v1636
          %v1652 = vpack.c.b16 %v1639, %v1638
          %v1653 = vpack.c.b16 %v1641, %v1640
          %v1654 = vpack.c.b16 %v1643, %v1642
          %v1655 = vpack.c.b16 %v1645, %v1644
          %v1656 = vpack.c.b16 %v1647, %v1646
          %v1657 = vpack.c.b16 %v1649, %v1648
          %1666 = vmatprep.subr.bf16.mxu0 0
          %1667 = vmatpush1.bf16.msra.mxu0 %v1650
          %1668 = vmatprep.subr.bf16.mxu0 0
          %1669 = vmatpush1.bf16.msra.mxu0 %v1651
          %1670 = vmatprep.subr.bf16.mxu0 0
          %1671 = vmatpush1.bf16.msra.mxu0 %v1652
          %1672 = vmatprep.subr.bf16.mxu0 0
          %1673 = vmatpush1.bf16.msra.mxu0 %v1653
          %1674 = vmatprep.subr.bf16.mxu0 0
          %1675 = vmatpush1.bf16.msra.mxu0 %v1654
          %1676 = vmatprep.subr.bf16.mxu0 0
          %1677 = vmatpush1.bf16.msra.mxu0 %v1655
          %1678 = vmatprep.subr.bf16.mxu0 0
          %1679 = vmatpush1.bf16.msra.mxu0 %v1656
          %1680 = vmatprep.subr.bf16.mxu0 0
          %1681 = vmatpush1.bf16.msra.mxu0 %v1657
          %1682 = vmatprep.subr.bf16.mxu0 0
          %1683 = vmatpush1.bf16.msra.mxu0 0
          %1684 = vmatprep.subr.bf16.mxu0 0
          %1685 = vmatpush1.bf16.msra.mxu0 0
          %1686 = vmatprep.subr.bf16.mxu0 0
          %1687 = vmatpush1.bf16.msra.mxu0 0
          %1688 = vmatprep.subr.bf16.mxu0 0
          %1689 = vmatpush1.bf16.msra.mxu0 0
          %1690 = vmatprep.subr.bf16.mxu0 0
          %1691 = vmatpush1.bf16.msra.mxu0 0
          %1692 = vmatprep.subr.bf16.mxu0 0
          %1693 = vmatpush1.bf16.msra.mxu0 0
          %1694 = vmatprep.subr.bf16.mxu0 0
          %1695 = vmatpush1.bf16.msra.mxu0 0
          %1696 = vmatprep.subr.bf16.mxu0 0
          %1697 = vmatpush1.bf16.msra.mxu0 0
          %1698 = vmatprep.mubr.bf16.mxu0 0
          %1699 = vmatmul.mubr.bf16.gmra.mrb[0].mxu0 %v1110
          %v1700 = vpop.f32.mrb[0].mxu0
          %v1701 = vadd.f32 0.0, %v1700
          %v1702 = vpop.f32.mrb[0].mxu0
          %v1703 = vpop.f32.mrb[0].mxu0
          %v1704 = vadd.f32 0.0, %v1703
          %v1705 = vpop.f32.mrb[0].mxu0
          %1706 = vmatprep.mubr.bf16.mxu0 0
          %1707 = vmatmul.mubr.bf16.gmra.mrb[0].mxu0 %v1111
          %v1708 = vpop.f32.mrb[0].mxu0
          %v1709 = vadd.f32 0.0, %v1708
          %v1710 = vpop.f32.mrb[0].mxu0
          %v1711 = vpop.f32.mrb[0].mxu0
          %v1712 = vadd.f32 0.0, %v1711
          %v1713 = vpop.f32.mrb[0].mxu0
          %1714 = vmatprep.mubr.bf16.mxu0 0
          %1715 = vmatmul.mubr.bf16.gmra.mrb[0].mxu0 %v1112
          %v1716 = vpop.f32.mrb[0].mxu0
          %v1717 = vadd.f32 0.0, %v1716
          %v1718 = vpop.f32.mrb[0].mxu0
          %v1719 = vpop.f32.mrb[0].mxu0
          %v1720 = vadd.f32 0.0, %v1719
          %v1721 = vpop.f32.mrb[0].mxu0
          %1722 = vmatprep.mubr.bf16.mxu0 0
          %1723 = vmatmul.mubr.bf16.gmra.mrb[0].mxu0 %v1113
          %v1724 = vpop.f32.mrb[0].mxu0
          %v1725 = vadd.f32 0.0, %v1724
          %v1726 = vpop.f32.mrb[0].mxu0
          %v1727 = vpop.f32.mrb[0].mxu0
          %v1728 = vadd.f32 0.0, %v1727
          %v1729 = vpop.f32.mrb[0].mxu0
          %1730 = vmatprep.mubr.bf16.mxu0 0
          %1731 = vmatmul.mubr.bf16.gmra.mrb[0].mxu0 %v1114
          %v1732 = vpop.f32.mrb[0].mxu0
          %v1733 = vadd.f32 0.0, %v1732
          %v1734 = vpop.f32.mrb[0].mxu0
          %v1735 = vpop.f32.mrb[0].mxu0
          %v1736 = vadd.f32 0.0, %v1735
          %v1737 = vpop.f32.mrb[0].mxu0
          %1738 = vmatprep.mubr.bf16.mxu0 0
          %1739 = vmatmul.mubr.bf16.gmra.mrb[0].mxu0 %v1115
          %v1740 = vpop.f32.mrb[0].mxu0
          %v1741 = vadd.f32 0.0, %v1740
          %v1742 = vpop.f32.mrb[0].mxu0
          %v1743 = vpop.f32.mrb[0].mxu0
          %v1744 = vadd.f32 0.0, %v1743
          %v1745 = vpop.f32.mrb[0].mxu0
          %1746 = vmatprep.mubr.bf16.mxu0 0
          %1747 = vmatmul.mubr.bf16.gmra.mrb[0].mxu0 %v1116
          %v1748 = vpop.f32.mrb[0].mxu0
          %v1749 = vadd.f32 0.0, %v1748
          %v1750 = vpop.f32.mrb[0].mxu0
          %v1751 = vpop.f32.mrb[0].mxu0
          %v1752 = vadd.f32 0.0, %v1751
          %v1753 = vpop.f32.mrb[0].mxu0
          %1754 = vmatprep.mubr.bf16.mxu0 0
          %1755 = vmatmul.mubr.bf16.gmra.mrb[0].mxu0 %v1117
          %v1756 = vpop.f32.mrb[0].mxu0
          %v1757 = vadd.f32 0.0, %v1756
          %v1758 = vpop.f32.mrb[0].mxu0
          %v1759 = vpop.f32.mrb[0].mxu0
          %v1760 = vadd.f32 0.0, %v1759
          %v1761 = vpop.f32.mrb[0].mxu0
          %1762 = vmatprep.mubr.bf16.mxu0 0
          %1763 = vmatmul.mubr.bf16.gmra.mrb[0].mxu0 %v1118
          %v1764 = vpop.f32.mrb[0].mxu0
          %v1765 = vadd.f32 0.0, %v1764
          %v1766 = vpop.f32.mrb[0].mxu0
          %v1767 = vpop.f32.mrb[0].mxu0
          %v1768 = vadd.f32 0.0, %v1767
          %v1769 = vpop.f32.mrb[0].mxu0
          %1770 = vmatprep.mubr.bf16.mxu0 0
          %1771 = vmatmul.mubr.bf16.gmra.mrb[0].mxu0 %v1119
          %v1772 = vpop.f32.mrb[0].mxu0
          %v1773 = vadd.f32 0.0, %v1772
          %v1774 = vpop.f32.mrb[0].mxu0
          %v1775 = vpop.f32.mrb[0].mxu0
          %v1776 = vadd.f32 0.0, %v1775
          %v1777 = vpop.f32.mrb[0].mxu0
          %1778 = vmatprep.mubr.bf16.mxu0 0
          %1779 = vmatmul.mubr.bf16.gmra.mrb[0].mxu0 %v1120
          %v1780 = vpop.f32.mrb[0].mxu0
          %v1781 = vadd.f32 0.0, %v1780
          %v1782 = vpop.f32.mrb[0].mxu0
          %v1783 = vpop.f32.mrb[0].mxu0
          %v1784 = vadd.f32 0.0, %v1783
          %v1785 = vpop.f32.mrb[0].mxu0
          %1786 = vmatprep.mubr.bf16.mxu0 0
          %1787 = vmatmul.mubr.bf16.gmra.mrb[0].mxu0 %v1121
          %v1788 = vpop.f32.mrb[0].mxu0
          %v1789 = vadd.f32 0.0, %v1788
          %v1790 = vpop.f32.mrb[0].mxu0
          %v1791 = vpop.f32.mrb[0].mxu0
          %v1792 = vadd.f32 0.0, %v1791
          %v1793 = vpop.f32.mrb[0].mxu0
          %1794 = vdwg.mxu0
          %v1795 = vrot.slane %v1701, 2
          %v1796 = vrot.slane %v1704, 2
          %v1797 = vrot.slane %v1709, 2
          %v1798 = vrot.slane %v1712, 2
          %v1799 = vrot.slane %v1717, 2
          %v1800 = vrot.slane %v1720, 2
          %v1801 = vrot.slane %v1725, 2
          %v1802 = vrot.slane %v1728, 2
          %v1803 = vrot.slane %v1733, 2
          %v1804 = vrot.slane %v1736, 2
          %v1805 = vrot.slane %v1741, 2
          %v1806 = vrot.slane %v1744, 2
          %v1807 = vrot.slane %v1749, 2
          %v1808 = vrot.slane %v1752, 2
          %v1809 = vrot.slane %v1757, 2
          %v1810 = vrot.slane %v1760, 2
          %v1811 = vrot.slane %v1765, 2
          %v1812 = vrot.slane %v1768, 2
          %v1813 = vrot.slane %v1773, 2
          %v1814 = vrot.slane %v1776, 2
          %v1815 = vrot.slane %v1781, 2
          %v1816 = vrot.slane %v1784, 2
          %v1817 = vrot.slane %v1789, 2
          %v1818 = vrot.slane %v1792, 2
          %v1819 = vsel %vm968, %v1817, %v1818
          %v1820 = vsel %vm968, %v1816, %v1817
          %v1821 = vsel %vm968, %v1815, %v1816
          %v1822 = vsel %vm968, %v1814, %v1815
          %v1823 = vsel %vm968, %v1813, %v1814
          %v1824 = vsel %vm968, %v1812, %v1813
          %v1825 = vsel %vm968, %v1811, %v1812
          %v1826 = vsel %vm968, %v1810, %v1811
          %v1827 = vsel %vm968, %v1809, %v1810
          %v1828 = vsel %vm968, %v1808, %v1809
          %v1829 = vsel %vm968, %v1807, %v1808
          %v1830 = vsel %vm968, %v1806, %v1807
          %v1831 = vsel %vm968, %v1805, %v1806
          %v1832 = vsel %vm968, %v1804, %v1805
          %v1833 = vsel %vm968, %v1803, %v1804
          %v1834 = vsel %vm968, %v1802, %v1803
          %v1835 = vsel %vm968, %v1801, %v1802
          %v1836 = vsel %vm968, %v1800, %v1801
          %v1837 = vsel %vm968, %v1799, %v1800
          %v1838 = vsel %vm968, %v1798, %v1799
          %v1839 = vsel %vm968, %v1797, %v1798
          %v1840 = vsel %vm968, %v1796, %v1797
          %v1841 = vsel %vm968, %v1795, %v1796
          %v1842 = vsel %vm968, %v1818, %v1795
          %v1843 = vadd.f32 %v1577, %v1841
          %v1844 = vadd.f32 %v1578, %v1840
          %v1845 = vadd.f32 %v1579, %v1839
          %v1846 = vadd.f32 %v1580, %v1838
          %v1847 = vadd.f32 %v1581, %v1837
          %v1848 = vadd.f32 %v1582, %v1836
          %v1849 = vadd.f32 %v1583, %v1835
          %v1850 = vadd.f32 %v1584, %v1834
          %v1851 = vadd.f32 %v1585, %v1833
          %v1852 = vadd.f32 %v1586, %v1832
          %v1853 = vadd.f32 %v1587, %v1831
          %v1854 = vadd.f32 %v1588, %v1830
          %v1855 = vadd.f32 %v1589, %v1829
          %v1856 = vadd.f32 %v1590, %v1828
          %v1857 = vadd.f32 %v1591, %v1827
          %v1858 = vadd.f32 %v1592, %v1826
          %v1859 = vadd.f32 %v1593, %v1825
          %v1860 = vadd.f32 %v1594, %v1824
          %v1861 = vadd.f32 %v1595, %v1823
          %v1862 = vadd.f32 %v1596, %v1822
          %v1863 = vadd.f32 %v1597, %v1821
          %v1864 = vadd.f32 %v1598, %v1820
          %v1865 = vadd.f32 %v1599, %v1819
          %v1866 = vadd.f32 %v1600, %v1842
          %s1867 = sadd.s32 %s212, 2
          %s1868 = smul.u32 %s1867, 3
          %s1869 = smul.addr %s1868, 4
          %s1870 = scalar_lea.vmem %s177, %s1869 [#allocation2]
          %v1871 = vld [vmem:[%s1870] sm:$0xf]
          %v1872 = vld [vmem:[%s1870 + $0x4] sm:$0xf]
          %v1873 = vld [vmem:[%s1870 + $0x8] sm:$0xf]
          %v1874 = vld [vmem:[%s1870 + $0xc] sm:$0xf]
          %v1875 = vld [vmem:[%s1870 + $0x10] sm:$0xf]
          %v1876 = vld [vmem:[%s1870 + $0x14] sm:$0xf]
          %v1877 = vld [vmem:[%s1870 + $0x18] sm:$0xf]
          %v1878 = vld [vmem:[%s1870 + $0x1c] sm:$0xf]
          %v1879 = vld [vmem:[%s1870 + $0x20] sm:$0xf]
          %v1880 = vld [vmem:[%s1870 + $0x24] sm:$0xf]
          %v1881 = vld [vmem:[%s1870 + $0x28] sm:$0xf]
          %v1882 = vld [vmem:[%s1870 + $0x2c] sm:$0xf]
          %v1883 = vld [vmem:[%s1870 + $0x30] sm:$0xf]
          %v1884 = vld [vmem:[%s1870 + $0x34] sm:$0xf]
          %v1885 = vld [vmem:[%s1870 + $0x38] sm:$0xf]
          %v1886 = vld [vmem:[%s1870 + $0x3c] sm:$0xf]
          %v1887 = vld [vmem:[%s1870 + $0x40] sm:$0xf]
          %v1888 = vld [vmem:[%s1870 + $0x44] sm:$0xf]
          %v1889 = vld [vmem:[%s1870 + $0x48] sm:$0xf]
          %v1890 = vld [vmem:[%s1870 + $0x4c] sm:$0xf]
          %v1891 = vld [vmem:[%s1870 + $0x50] sm:$0xf]
          %v1892 = vld [vmem:[%s1870 + $0x54] sm:$0xf]
          %v1893 = vld [vmem:[%s1870 + $0x58] sm:$0xf]
          %v1894 = vld [vmem:[%s1870 + $0x5c] sm:$0xf]
          %s1895 = scalar_lea.vmem [#allocation5], 384
          %v1896 = vld [vmem:[%s1895] sm:$0xf]
          %v1897 = vld [vmem:[%s1895 + $0x4] sm:$0xf]
          %v1898 = vld [vmem:[%s1895 + $0x8] sm:$0xf]
          %v1899 = vld [vmem:[%s1895 + $0xc] sm:$0xf]
          %v1900 = vld [vmem:[%s1895 + $0x10] sm:$0xf]
          %v1901 = vld [vmem:[%s1895 + $0x14] sm:$0xf]
          %v1902 = vld [vmem:[%s1895 + $0x18] sm:$0xf]
          %v1903 = vld [vmem:[%s1895 + $0x1c] sm:$0xf]
          %v1904 = vld [vmem:[%s1895 + $0x20] sm:$0xf]
          %v1905 = vld [vmem:[%s1895 + $0x24] sm:$0xf]
          %v1906 = vld [vmem:[%s1895 + $0x28] sm:$0xf]
          %v1907 = vld [vmem:[%s1895 + $0x2c] sm:$0xf]
          %v1908 = vld [vmem:[%s1895 + $0x30] sm:$0xf]
          %v1909 = vld [vmem:[%s1895 + $0x34] sm:$0xf]
          %v1910 = vld [vmem:[%s1895 + $0x38] sm:$0xf]
          %v1911 = vld [vmem:[%s1895 + $0x3c] sm:$0xf]
          %v1936 = vunpack.c.l.b16 %v1871
          %v1937 = vunpack.c.l.b16 %v1872
          %v1938 = vunpack.c.l.b16 %v1873
          %v1939 = vunpack.c.l.b16 %v1874
          %v1940 = vunpack.c.l.b16 %v1875
          %v1941 = vunpack.c.l.b16 %v1876
          %v1942 = vunpack.c.l.b16 %v1877
          %v1943 = vunpack.c.l.b16 %v1878
          %v1944 = vunpack.c.l.b16 %v1879
          %v1945 = vunpack.c.l.b16 %v1880
          %v1946 = vunpack.c.l.b16 %v1881
          %v1947 = vunpack.c.l.b16 %v1882
          %v1948 = vunpack.c.l.b16 %v1883
          %v1949 = vunpack.c.l.b16 %v1884
          %v1950 = vunpack.c.l.b16 %v1885
          %v1951 = vunpack.c.l.b16 %v1886
          %v1952 = vunpack.c.l.b16 %v1887
          %v1953 = vunpack.c.l.b16 %v1888
          %v1954 = vunpack.c.l.b16 %v1889
          %v1955 = vunpack.c.l.b16 %v1890
          %v1956 = vunpack.c.l.b16 %v1891
          %v1957 = vunpack.c.l.b16 %v1892
          %v1958 = vunpack.c.l.b16 %v1893
          %v1959 = vunpack.c.l.b16 %v1894
          %v1960 = vpack.c.b16 %v1937, %v1936
          %v1961 = vpack.c.b16 %v1939, %v1938
          %v1962 = vpack.c.b16 %v1941, %v1940
          %v1963 = vpack.c.b16 %v1943, %v1942
          %v1964 = vpack.c.b16 %v1945, %v1944
          %v1965 = vpack.c.b16 %v1947, %v1946
          %v1966 = vpack.c.b16 %v1949, %v1948
          %v1967 = vpack.c.b16 %v1951, %v1950
          %v1968 = vpack.c.b16 %v1953, %v1952
          %v1969 = vpack.c.b16 %v1955, %v1954
          %v1970 = vpack.c.b16 %v1957, %v1956
          %v1971 = vpack.c.b16 %v1959, %v1958
          %v2000 = vunpack.c.l.b16 %v1896
          %v2001 = vunpack.c.l.b16 %v1897
          %v2002 = vunpack.c.l.b16 %v1898
          %v2003 = vunpack.c.l.b16 %v1899
          %v2004 = vunpack.c.l.b16 %v1900
          %v2005 = vunpack.c.l.b16 %v1901
          %v2006 = vunpack.c.l.b16 %v1902
          %v2007 = vunpack.c.l.b16 %v1903
          %v2008 = vunpack.c.l.b16 %v1904
          %v2009 = vunpack.c.l.b16 %v1905
          %v2010 = vunpack.c.l.b16 %v1906
          %v2011 = vunpack.c.l.b16 %v1907
          %v2012 = vunpack.c.l.b16 %v1908
          %v2013 = vunpack.c.l.b16 %v1909
          %v2014 = vunpack.c.l.b16 %v1910
          %v2015 = vunpack.c.l.b16 %v1911
          %v2016 = vpack.c.b16 %v2001, %v2000
          %v2017 = vpack.c.b16 %v2003, %v2002
          %v2018 = vpack.c.b16 %v2005, %v2004
          %v2019 = vpack.c.b16 %v2007, %v2006
          %v2020 = vpack.c.b16 %v2009, %v2008
          %v2021 = vpack.c.b16 %v2011, %v2010
          %v2022 = vpack.c.b16 %v2013, %v2012
          %v2023 = vpack.c.b16 %v2015, %v2014
          %2032 = vmatprep.subr.bf16.mxu0 0
          %2033 = vmatpush1.bf16.msra.mxu0 %v2016
          %2034 = vmatprep.subr.bf16.mxu0 0
          %2035 = vmatpush1.bf16.msra.mxu0 %v2017
          %2036 = vmatprep.subr.bf16.mxu0 0
          %2037 = vmatpush1.bf16.msra.mxu0 %v2018
          %2038 = vmatprep.subr.bf16.mxu0 0
          %2039 = vmatpush1.bf16.msra.mxu0 %v2019
          %2040 = vmatprep.subr.bf16.mxu0 0
          %2041 = vmatpush1.bf16.msra.mxu0 %v2020
          %2042 = vmatprep.subr.bf16.mxu0 0
          %2043 = vmatpush1.bf16.msra.mxu0 %v2021
          %2044 = vmatprep.subr.bf16.mxu0 0
          %2045 = vmatpush1.bf16.msra.mxu0 %v2022
          %2046 = vmatprep.subr.bf16.mxu0 0
          %2047 = vmatpush1.bf16.msra.mxu0 %v2023
          %2048 = vmatprep.subr.bf16.mxu0 0
          %2049 = vmatpush1.bf16.msra.mxu0 0
          %2050 = vmatprep.subr.bf16.mxu0 0
          %2051 = vmatpush1.bf16.msra.mxu0 0
          %2052 = vmatprep.subr.bf16.mxu0 0
          %2053 = vmatpush1.bf16.msra.mxu0 0
          %2054 = vmatprep.subr.bf16.mxu0 0
          %2055 = vmatpush1.bf16.msra.mxu0 0
          %2056 = vmatprep.subr.bf16.mxu0 0
          %2057 = vmatpush1.bf16.msra.mxu0 0
          %2058 = vmatprep.subr.bf16.mxu0 0
          %2059 = vmatpush1.bf16.msra.mxu0 0
          %2060 = vmatprep.subr.bf16.mxu0 0
          %2061 = vmatpush1.bf16.msra.mxu0 0
          %2062 = vmatprep.subr.bf16.mxu0 0
          %2063 = vmatpush1.bf16.msra.mxu0 0
          %2064 = vmatprep.mubr.bf16.mxu0 0
          %2065 = vmatmul.mubr.bf16.gmra.mrb[0].mxu0 %v1960
          %v2066 = vpop.f32.mrb[0].mxu0
          %v2067 = vadd.f32 0.0, %v2066
          %v2068 = vpop.f32.mrb[0].mxu0
          %v2069 = vpop.f32.mrb[0].mxu0
          %v2070 = vadd.f32 0.0, %v2069
          %v2071 = vpop.f32.mrb[0].mxu0
          %2072 = vmatprep.mubr.bf16.mxu0 0
          %2073 = vmatmul.mubr.bf16.gmra.mrb[0].mxu0 %v1961
          %v2074 = vpop.f32.mrb[0].mxu0
          %v2075 = vadd.f32 0.0, %v2074
          %v2076 = vpop.f32.mrb[0].mxu0
          %v2077 = vpop.f32.mrb[0].mxu0
          %v2078 = vadd.f32 0.0, %v2077
          %v2079 = vpop.f32.mrb[0].mxu0
          %2080 = vmatprep.mubr.bf16.mxu0 0
          %2081 = vmatmul.mubr.bf16.gmra.mrb[0].mxu0 %v1962
          %v2082 = vpop.f32.mrb[0].mxu0
          %v2083 = vadd.f32 0.0, %v2082
          %v2084 = vpop.f32.mrb[0].mxu0
          %v2085 = vpop.f32.mrb[0].mxu0
          %v2086 = vadd.f32 0.0, %v2085
          %v2087 = vpop.f32.mrb[0].mxu0
          %2088 = vmatprep.mubr.bf16.mxu0 0
          %2089 = vmatmul.mubr.bf16.gmra.mrb[0].mxu0 %v1963
          %v2090 = vpop.f32.mrb[0].mxu0
          %v2091 = vadd.f32 0.0, %v2090
          %v2092 = vpop.f32.mrb[0].mxu0
          %v2093 = vpop.f32.mrb[0].mxu0
          %v2094 = vadd.f32 0.0, %v2093
          %v2095 = vpop.f32.mrb[0].mxu0
          %2096 = vmatprep.mubr.bf16.mxu0 0
          %2097 = vmatmul.mubr.bf16.gmra.mrb[0].mxu0 %v1964
          %v2098 = vpop.f32.mrb[0].mxu0
          %v2099 = vadd.f32 0.0, %v2098
          %v2100 = vpop.f32.mrb[0].mxu0
          %v2101 = vpop.f32.mrb[0].mxu0
          %v2102 = vadd.f32 0.0, %v2101
          %v2103 = vpop.f32.mrb[0].mxu0
          %2104 = vmatprep.mubr.bf16.mxu0 0
          %2105 = vmatmul.mubr.bf16.gmra.mrb[0].mxu0 %v1965
          %v2106 = vpop.f32.mrb[0].mxu0
          %v2107 = vadd.f32 0.0, %v2106
          %v2108 = vpop.f32.mrb[0].mxu0
          %v2109 = vpop.f32.mrb[0].mxu0
          %v2110 = vadd.f32 0.0, %v2109
          %v2111 = vpop.f32.mrb[0].mxu0
          %2112 = vmatprep.mubr.bf16.mxu0 0
          %2113 = vmatmul.mubr.bf16.gmra.mrb[0].mxu0 %v1966
          %v2114 = vpop.f32.mrb[0].mxu0
          %v2115 = vadd.f32 0.0, %v2114
          %v2116 = vpop.f32.mrb[0].mxu0
          %v2117 = vpop.f32.mrb[0].mxu0
          %v2118 = vadd.f32 0.0, %v2117
          %v2119 = vpop.f32.mrb[0].mxu0
          %2120 = vmatprep.mubr.bf16.mxu0 0
          %2121 = vmatmul.mubr.bf16.gmra.mrb[0].mxu0 %v1967
          %v2122 = vpop.f32.mrb[0].mxu0
          %v2123 = vadd.f32 0.0, %v2122
          %v2124 = vpop.f32.mrb[0].mxu0
          %v2125 = vpop.f32.mrb[0].mxu0
          %v2126 = vadd.f32 0.0, %v2125
          %v2127 = vpop.f32.mrb[0].mxu0
          %2128 = vmatprep.mubr.bf16.mxu0 0
          %2129 = vmatmul.mubr.bf16.gmra.mrb[0].mxu0 %v1968
          %v2130 = vpop.f32.mrb[0].mxu0
          %v2131 = vadd.f32 0.0, %v2130
          %v2132 = vpop.f32.mrb[0].mxu0
          %v2133 = vpop.f32.mrb[0].mxu0
          %v2134 = vadd.f32 0.0, %v2133
          %v2135 = vpop.f32.mrb[0].mxu0
          %2136 = vmatprep.mubr.bf16.mxu0 0
          %2137 = vmatmul.mubr.bf16.gmra.mrb[0].mxu0 %v1969
          %v2138 = vpop.f32.mrb[0].mxu0
          %v2139 = vadd.f32 0.0, %v2138
          %v2140 = vpop.f32.mrb[0].mxu0
          %v2141 = vpop.f32.mrb[0].mxu0
          %v2142 = vadd.f32 0.0, %v2141
          %v2143 = vpop.f32.mrb[0].mxu0
          %2144 = vmatprep.mubr.bf16.mxu0 0
          %2145 = vmatmul.mubr.bf16.gmra.mrb[0].mxu0 %v1970
          %v2146 = vpop.f32.mrb[0].mxu0
          %v2147 = vadd.f32 0.0, %v2146
          %v2148 = vpop.f32.mrb[0].mxu0
          %v2149 = vpop.f32.mrb[0].mxu0
          %v2150 = vadd.f32 0.0, %v2149
          %v2151 = vpop.f32.mrb[0].mxu0
          %2152 = vmatprep.mubr.bf16.mxu0 0
          %2153 = vmatmul.mubr.bf16.gmra.mrb[0].mxu0 %v1971
          %v2154 = vpop.f32.mrb[0].mxu0
          %v2155 = vadd.f32 0.0, %v2154
          %v2156 = vpop.f32.mrb[0].mxu0
          %v2157 = vpop.f32.mrb[0].mxu0
          %v2158 = vadd.f32 0.0, %v2157
          %v2159 = vpop.f32.mrb[0].mxu0
          %2160 = vdwg.mxu0
          %v2161 = vadd.f32 %v1843, %v2067
          %v2162 = vadd.f32 %v1844, %v2070
          %v2163 = vadd.f32 %v1845, %v2075
          %v2164 = vadd.f32 %v1846, %v2078
          %v2165 = vadd.f32 %v1847, %v2083
          %v2166 = vadd.f32 %v1848, %v2086
          %v2167 = vadd.f32 %v1849, %v2091
          %v2168 = vadd.f32 %v1850, %v2094
          %v2169 = vadd.f32 %v1851, %v2099
          %v2170 = vadd.f32 %v1852, %v2102
          %v2171 = vadd.f32 %v1853, %v2107
          %v2172 = vadd.f32 %v1854, %v2110
          %v2173 = vadd.f32 %v1855, %v2115
          %v2174 = vadd.f32 %v1856, %v2118
          %v2175 = vadd.f32 %v1857, %v2123
          %v2176 = vadd.f32 %v1858, %v2126
          %v2177 = vadd.f32 %v1859, %v2131
          %v2178 = vadd.f32 %v1860, %v2134
          %v2179 = vadd.f32 %v1861, %v2139
          %v2180 = vadd.f32 %v1862, %v2142
          %v2181 = vadd.f32 %v1863, %v2147
          %v2182 = vadd.f32 %v1864, %v2150
          %v2183 = vadd.f32 %v1865, %v2155
          %v2184 = vadd.f32 %v1866, %v2158
          %s2185 = scalar_lea.vmem [#allocation5], 448
          %v2186 = vld [vmem:[%s2185] sm:$0xf]
          %v2187 = vld [vmem:[%s2185 + $0x4] sm:$0xf]
          %v2188 = vld [vmem:[%s2185 + $0x8] sm:$0xf]
          %v2189 = vld [vmem:[%s2185 + $0xc] sm:$0xf]
          %v2190 = vld [vmem:[%s2185 + $0x10] sm:$0xf]
          %v2191 = vld [vmem:[%s2185 + $0x14] sm:$0xf]
          %v2192 = vld [vmem:[%s2185 + $0x18] sm:$0xf]
          %v2193 = vld [vmem:[%s2185 + $0x1c] sm:$0xf]
          %v2194 = vld [vmem:[%s2185 + $0x20] sm:$0xf]
          %v2195 = vld [vmem:[%s2185 + $0x24] sm:$0xf]
          %v2196 = vld [vmem:[%s2185 + $0x28] sm:$0xf]
          %v2197 = vld [vmem:[%s2185 + $0x2c] sm:$0xf]
          %v2198 = vld [vmem:[%s2185 + $0x30] sm:$0xf]
          %v2199 = vld [vmem:[%s2185 + $0x34] sm:$0xf]
          %v2200 = vld [vmem:[%s2185 + $0x38] sm:$0xf]
          %v2201 = vld [vmem:[%s2185 + $0x3c] sm:$0xf]
          %v2218 = vunpack.c.l.b16 %v2186
          %v2219 = vunpack.c.l.b16 %v2187
          %v2220 = vunpack.c.l.b16 %v2188
          %v2221 = vunpack.c.l.b16 %v2189
          %v2222 = vunpack.c.l.b16 %v2190
          %v2223 = vunpack.c.l.b16 %v2191
          %v2224 = vunpack.c.l.b16 %v2192
          %v2225 = vunpack.c.l.b16 %v2193
          %v2226 = vunpack.c.l.b16 %v2194
          %v2227 = vunpack.c.l.b16 %v2195
          %v2228 = vunpack.c.l.b16 %v2196
          %v2229 = vunpack.c.l.b16 %v2197
          %v2230 = vunpack.c.l.b16 %v2198
          %v2231 = vunpack.c.l.b16 %v2199
          %v2232 = vunpack.c.l.b16 %v2200
          %v2233 = vunpack.c.l.b16 %v2201
          %v2234 = vpack.c.b16 %v2219, %v2218
          %v2235 = vpack.c.b16 %v2221, %v2220
          %v2236 = vpack.c.b16 %v2223, %v2222
          %v2237 = vpack.c.b16 %v2225, %v2224
          %v2238 = vpack.c.b16 %v2227, %v2226
          %v2239 = vpack.c.b16 %v2229, %v2228
          %v2240 = vpack.c.b16 %v2231, %v2230
          %v2241 = vpack.c.b16 %v2233, %v2232
          %2250 = vmatprep.subr.bf16.mxu0 0
          %2251 = vmatpush1.bf16.msra.mxu0 %v2234
          %2252 = vmatprep.subr.bf16.mxu0 0
          %2253 = vmatpush1.bf16.msra.mxu0 %v2235
          %2254 = vmatprep.subr.bf16.mxu0 0
          %2255 = vmatpush1.bf16.msra.mxu0 %v2236
          %2256 = vmatprep.subr.bf16.mxu0 0
          %2257 = vmatpush1.bf16.msra.mxu0 %v2237
          %2258 = vmatprep.subr.bf16.mxu0 0
          %2259 = vmatpush1.bf16.msra.mxu0 %v2238
          %2260 = vmatprep.subr.bf16.mxu0 0
          %2261 = vmatpush1.bf16.msra.mxu0 %v2239
          %2262 = vmatprep.subr.bf16.mxu0 0
          %2263 = vmatpush1.bf16.msra.mxu0 %v2240
          %2264 = vmatprep.subr.bf16.mxu0 0
          %2265 = vmatpush1.bf16.msra.mxu0 %v2241
          %2266 = vmatprep.subr.bf16.mxu0 0
          %2267 = vmatpush1.bf16.msra.mxu0 0
          %2268 = vmatprep.subr.bf16.mxu0 0
          %2269 = vmatpush1.bf16.msra.mxu0 0
          %2270 = vmatprep.subr.bf16.mxu0 0
          %2271 = vmatpush1.bf16.msra.mxu0 0
          %2272 = vmatprep.subr.bf16.mxu0 0
          %2273 = vmatpush1.bf16.msra.mxu0 0
          %2274 = vmatprep.subr.bf16.mxu0 0
          %2275 = vmatpush1.bf16.msra.mxu0 0
          %2276 = vmatprep.subr.bf16.mxu0 0
          %2277 = vmatpush1.bf16.msra.mxu0 0
          %2278 = vmatprep.subr.bf16.mxu0 0
          %2279 = vmatpush1.bf16.msra.mxu0 0
          %2280 = vmatprep.subr.bf16.mxu0 0
          %2281 = vmatpush1.bf16.msra.mxu0 0
          %2282 = vmatprep.mubr.bf16.mxu0 0
          %2283 = vmatmul.mubr.bf16.gmra.mrb[0].mxu0 %v1960
          %v2284 = vpop.f32.mrb[0].mxu0
          %v2285 = vadd.f32 0.0, %v2284
          %v2286 = vpop.f32.mrb[0].mxu0
          %v2287 = vpop.f32.mrb[0].mxu0
          %v2288 = vadd.f32 0.0, %v2287
          %v2289 = vpop.f32.mrb[0].mxu0
          %2290 = vmatprep.mubr.bf16.mxu0 0
          %2291 = vmatmul.mubr.bf16.gmra.mrb[0].mxu0 %v1961
          %v2292 = vpop.f32.mrb[0].mxu0
          %v2293 = vadd.f32 0.0, %v2292
          %v2294 = vpop.f32.mrb[0].mxu0
          %v2295 = vpop.f32.mrb[0].mxu0
          %v2296 = vadd.f32 0.0, %v2295
          %v2297 = vpop.f32.mrb[0].mxu0
          %2298 = vmatprep.mubr.bf16.mxu0 0
          %2299 = vmatmul.mubr.bf16.gmra.mrb[0].mxu0 %v1962
          %v2300 = vpop.f32.mrb[0].mxu0
          %v2301 = vadd.f32 0.0, %v2300
          %v2302 = vpop.f32.mrb[0].mxu0
          %v2303 = vpop.f32.mrb[0].mxu0
          %v2304 = vadd.f32 0.0, %v2303
          %v2305 = vpop.f32.mrb[0].mxu0
          %2306 = vmatprep.mubr.bf16.mxu0 0
          %2307 = vmatmul.mubr.bf16.gmra.mrb[0].mxu0 %v1963
          %v2308 = vpop.f32.mrb[0].mxu0
          %v2309 = vadd.f32 0.0, %v2308
          %v2310 = vpop.f32.mrb[0].mxu0
          %v2311 = vpop.f32.mrb[0].mxu0
          %v2312 = vadd.f32 0.0, %v2311
          %v2313 = vpop.f32.mrb[0].mxu0
          %2314 = vmatprep.mubr.bf16.mxu0 0
          %2315 = vmatmul.mubr.bf16.gmra.mrb[0].mxu0 %v1964
          %v2316 = vpop.f32.mrb[0].mxu0
          %v2317 = vadd.f32 0.0, %v2316
          %v2318 = vpop.f32.mrb[0].mxu0
          %v2319 = vpop.f32.mrb[0].mxu0
          %v2320 = vadd.f32 0.0, %v2319
          %v2321 = vpop.f32.mrb[0].mxu0
          %2322 = vmatprep.mubr.bf16.mxu0 0
          %2323 = vmatmul.mubr.bf16.gmra.mrb[0].mxu0 %v1965
          %v2324 = vpop.f32.mrb[0].mxu0
          %v2325 = vadd.f32 0.0, %v2324
          %v2326 = vpop.f32.mrb[0].mxu0
          %v2327 = vpop.f32.mrb[0].mxu0
          %v2328 = vadd.f32 0.0, %v2327
          %v2329 = vpop.f32.mrb[0].mxu0
          %2330 = vmatprep.mubr.bf16.mxu0 0
          %2331 = vmatmul.mubr.bf16.gmra.mrb[0].mxu0 %v1966
          %v2332 = vpop.f32.mrb[0].mxu0
          %v2333 = vadd.f32 0.0, %v2332
          %v2334 = vpop.f32.mrb[0].mxu0
          %v2335 = vpop.f32.mrb[0].mxu0
          %v2336 = vadd.f32 0.0, %v2335
          %v2337 = vpop.f32.mrb[0].mxu0
          %2338 = vmatprep.mubr.bf16.mxu0 0
          %2339 = vmatmul.mubr.bf16.gmra.mrb[0].mxu0 %v1967
          %v2340 = vpop.f32.mrb[0].mxu0
          %v2341 = vadd.f32 0.0, %v2340
          %v2342 = vpop.f32.mrb[0].mxu0
          %v2343 = vpop.f32.mrb[0].mxu0
          %v2344 = vadd.f32 0.0, %v2343
          %v2345 = vpop.f32.mrb[0].mxu0
          %2346 = vmatprep.mubr.bf16.mxu0 0
          %2347 = vmatmul.mubr.bf16.gmra.mrb[0].mxu0 %v1968
          %v2348 = vpop.f32.mrb[0].mxu0
          %v2349 = vadd.f32 0.0, %v2348
          %v2350 = vpop.f32.mrb[0].mxu0
          %v2351 = vpop.f32.mrb[0].mxu0
          %v2352 = vadd.f32 0.0, %v2351
          %v2353 = vpop.f32.mrb[0].mxu0
          %2354 = vmatprep.mubr.bf16.mxu0 0
          %2355 = vmatmul.mubr.bf16.gmra.mrb[0].mxu0 %v1969
          %v2356 = vpop.f32.mrb[0].mxu0
          %v2357 = vadd.f32 0.0, %v2356
          %v2358 = vpop.f32.mrb[0].mxu0
          %v2359 = vpop.f32.mrb[0].mxu0
          %v2360 = vadd.f32 0.0, %v2359
          %v2361 = vpop.f32.mrb[0].mxu0
          %2362 = vmatprep.mubr.bf16.mxu0 0
          %2363 = vmatmul.mubr.bf16.gmra.mrb[0].mxu0 %v1970
          %v2364 = vpop.f32.mrb[0].mxu0
          %v2365 = vadd.f32 0.0, %v2364
          %v2366 = vpop.f32.mrb[0].mxu0
          %v2367 = vpop.f32.mrb[0].mxu0
          %v2368 = vadd.f32 0.0, %v2367
          %v2369 = vpop.f32.mrb[0].mxu0
          %2370 = vmatprep.mubr.bf16.mxu0 0
          %2371 = vmatmul.mubr.bf16.gmra.mrb[0].mxu0 %v1971
          %v2372 = vpop.f32.mrb[0].mxu0
          %v2373 = vadd.f32 0.0, %v2372
          %v2374 = vpop.f32.mrb[0].mxu0
          %v2375 = vpop.f32.mrb[0].mxu0
          %v2376 = vadd.f32 0.0, %v2375
          %v2377 = vpop.f32.mrb[0].mxu0
          %2378 = vdwg.mxu0
          %v2379 = vrot.slane %v2285, 1
          %v2380 = vrot.slane %v2288, 1
          %v2381 = vrot.slane %v2293, 1
          %v2382 = vrot.slane %v2296, 1
          %v2383 = vrot.slane %v2301, 1
          %v2384 = vrot.slane %v2304, 1
          %v2385 = vrot.slane %v2309, 1
          %v2386 = vrot.slane %v2312, 1
          %v2387 = vrot.slane %v2317, 1
          %v2388 = vrot.slane %v2320, 1
          %v2389 = vrot.slane %v2325, 1
          %v2390 = vrot.slane %v2328, 1
          %v2391 = vrot.slane %v2333, 1
          %v2392 = vrot.slane %v2336, 1
          %v2393 = vrot.slane %v2341, 1
          %v2394 = vrot.slane %v2344, 1
          %v2395 = vrot.slane %v2349, 1
          %v2396 = vrot.slane %v2352, 1
          %v2397 = vrot.slane %v2357, 1
          %v2398 = vrot.slane %v2360, 1
          %v2399 = vrot.slane %v2365, 1
          %v2400 = vrot.slane %v2368, 1
          %v2401 = vrot.slane %v2373, 1
          %v2402 = vrot.slane %v2376, 1
          %v2403 = vsel %vm548, %v2401, %v2402
          %v2404 = vsel %vm548, %v2400, %v2401
          %v2405 = vsel %vm548, %v2399, %v2400
          %v2406 = vsel %vm548, %v2398, %v2399
          %v2407 = vsel %vm548, %v2397, %v2398
          %v2408 = vsel %vm548, %v2396, %v2397
          %v2409 = vsel %vm548, %v2395, %v2396
          %v2410 = vsel %vm548, %v2394, %v2395
          %v2411 = vsel %vm548, %v2393, %v2394
          %v2412 = vsel %vm548, %v2392, %v2393
          %v2413 = vsel %vm548, %v2391, %v2392
          %v2414 = vsel %vm548, %v2390, %v2391
          %v2415 = vsel %vm548, %v2389, %v2390
          %v2416 = vsel %vm548, %v2388, %v2389
          %v2417 = vsel %vm548, %v2387, %v2388
          %v2418 = vsel %vm548, %v2386, %v2387
          %v2419 = vsel %vm548, %v2385, %v2386
          %v2420 = vsel %vm548, %v2384, %v2385
          %v2421 = vsel %vm548, %v2383, %v2384
          %v2422 = vsel %vm548, %v2382, %v2383
          %v2423 = vsel %vm548, %v2381, %v2382
          %v2424 = vsel %vm548, %v2380, %v2381
          %v2425 = vsel %vm548, %v2379, %v2380
          %v2426 = vsel %vm548, %v2402, %v2379
          %v2427 = vadd.f32 %v2161, %v2425
          %v2428 = vadd.f32 %v2162, %v2424
          %v2429 = vadd.f32 %v2163, %v2423
          %v2430 = vadd.f32 %v2164, %v2422
          %v2431 = vadd.f32 %v2165, %v2421
          %v2432 = vadd.f32 %v2166, %v2420
          %v2433 = vadd.f32 %v2167, %v2419
          %v2434 = vadd.f32 %v2168, %v2418
          %v2435 = vadd.f32 %v2169, %v2417
          %v2436 = vadd.f32 %v2170, %v2416
          %v2437 = vadd.f32 %v2171, %v2415
          %v2438 = vadd.f32 %v2172, %v2414
          %v2439 = vadd.f32 %v2173, %v2413
          %v2440 = vadd.f32 %v2174, %v2412
          %v2441 = vadd.f32 %v2175, %v2411
          %v2442 = vadd.f32 %v2176, %v2410
          %v2443 = vadd.f32 %v2177, %v2409
          %v2444 = vadd.f32 %v2178, %v2408
          %v2445 = vadd.f32 %v2179, %v2407
          %v2446 = vadd.f32 %v2180, %v2406
          %v2447 = vadd.f32 %v2181, %v2405
          %v2448 = vadd.f32 %v2182, %v2404
          %v2449 = vadd.f32 %v2183, %v2403
          %v2450 = vadd.f32 %v2184, %v2426
          %s2451 = scalar_lea.vmem [#allocation5], 512
          %v2452 = vld [vmem:[%s2451] sm:$0xf]
          %v2453 = vld [vmem:[%s2451 + $0x4] sm:$0xf]
          %v2454 = vld [vmem:[%s2451 + $0x8] sm:$0xf]
          %v2455 = vld [vmem:[%s2451 + $0xc] sm:$0xf]
          %v2456 = vld [vmem:[%s2451 + $0x10] sm:$0xf]
          %v2457 = vld [vmem:[%s2451 + $0x14] sm:$0xf]
          %v2458 = vld [vmem:[%s2451 + $0x18] sm:$0xf]
          %v2459 = vld [vmem:[%s2451 + $0x1c] sm:$0xf]
          %v2460 = vld [vmem:[%s2451 + $0x20] sm:$0xf]
          %v2461 = vld [vmem:[%s2451 + $0x24] sm:$0xf]
          %v2462 = vld [vmem:[%s2451 + $0x28] sm:$0xf]
          %v2463 = vld [vmem:[%s2451 + $0x2c] sm:$0xf]
          %v2464 = vld [vmem:[%s2451 + $0x30] sm:$0xf]
          %v2465 = vld [vmem:[%s2451 + $0x34] sm:$0xf]
          %v2466 = vld [vmem:[%s2451 + $0x38] sm:$0xf]
          %v2467 = vld [vmem:[%s2451 + $0x3c] sm:$0xf]
          %v2484 = vunpack.c.l.b16 %v2452
          %v2485 = vunpack.c.l.b16 %v2453
          %v2486 = vunpack.c.l.b16 %v2454
          %v2487 = vunpack.c.l.b16 %v2455
          %v2488 = vunpack.c.l.b16 %v2456
          %v2489 = vunpack.c.l.b16 %v2457
          %v2490 = vunpack.c.l.b16 %v2458
          %v2491 = vunpack.c.l.b16 %v2459
          %v2492 = vunpack.c.l.b16 %v2460
          %v2493 = vunpack.c.l.b16 %v2461
          %v2494 = vunpack.c.l.b16 %v2462
          %v2495 = vunpack.c.l.b16 %v2463
          %v2496 = vunpack.c.l.b16 %v2464
          %v2497 = vunpack.c.l.b16 %v2465
          %v2498 = vunpack.c.l.b16 %v2466
          %v2499 = vunpack.c.l.b16 %v2467
          %v2500 = vpack.c.b16 %v2485, %v2484
          %v2501 = vpack.c.b16 %v2487, %v2486
          %v2502 = vpack.c.b16 %v2489, %v2488
          %v2503 = vpack.c.b16 %v2491, %v2490
          %v2504 = vpack.c.b16 %v2493, %v2492
          %v2505 = vpack.c.b16 %v2495, %v2494
          %v2506 = vpack.c.b16 %v2497, %v2496
          %v2507 = vpack.c.b16 %v2499, %v2498
          %2516 = vmatprep.subr.bf16.mxu0 0
          %2517 = vmatpush1.bf16.msra.mxu0 %v2500
          %2518 = vmatprep.subr.bf16.mxu0 0
          %2519 = vmatpush1.bf16.msra.mxu0 %v2501
          %2520 = vmatprep.subr.bf16.mxu0 0
          %2521 = vmatpush1.bf16.msra.mxu0 %v2502
          %2522 = vmatprep.subr.bf16.mxu0 0
          %2523 = vmatpush1.bf16.msra.mxu0 %v2503
          %2524 = vmatprep.subr.bf16.mxu0 0
          %2525 = vmatpush1.bf16.msra.mxu0 %v2504
          %2526 = vmatprep.subr.bf16.mxu0 0
          %2527 = vmatpush1.bf16.msra.mxu0 %v2505
          %2528 = vmatprep.subr.bf16.mxu0 0
          %2529 = vmatpush1.bf16.msra.mxu0 %v2506
          %2530 = vmatprep.subr.bf16.mxu0 0
          %2531 = vmatpush1.bf16.msra.mxu0 %v2507
          %2532 = vmatprep.subr.bf16.mxu0 0
          %2533 = vmatpush1.bf16.msra.mxu0 0
          %2534 = vmatprep.subr.bf16.mxu0 0
          %2535 = vmatpush1.bf16.msra.mxu0 0
          %2536 = vmatprep.subr.bf16.mxu0 0
          %2537 = vmatpush1.bf16.msra.mxu0 0
          %2538 = vmatprep.subr.bf16.mxu0 0
          %2539 = vmatpush1.bf16.msra.mxu0 0
          %2540 = vmatprep.subr.bf16.mxu0 0
          %2541 = vmatpush1.bf16.msra.mxu0 0
          %2542 = vmatprep.subr.bf16.mxu0 0
          %2543 = vmatpush1.bf16.msra.mxu0 0
          %2544 = vmatprep.subr.bf16.mxu0 0
          %2545 = vmatpush1.bf16.msra.mxu0 0
          %2546 = vmatprep.subr.bf16.mxu0 0
          %2547 = vmatpush1.bf16.msra.mxu0 0
          %2548 = vmatprep.mubr.bf16.mxu0 0
          %2549 = vmatmul.mubr.bf16.gmra.mrb[0].mxu0 %v1960
          %v2550 = vpop.f32.mrb[0].mxu0
          %v2551 = vadd.f32 0.0, %v2550
          %v2552 = vpop.f32.mrb[0].mxu0
          %v2553 = vpop.f32.mrb[0].mxu0
          %v2554 = vadd.f32 0.0, %v2553
          %v2555 = vpop.f32.mrb[0].mxu0
          %2556 = vmatprep.mubr.bf16.mxu0 0
          %2557 = vmatmul.mubr.bf16.gmra.mrb[0].mxu0 %v1961
          %v2558 = vpop.f32.mrb[0].mxu0
          %v2559 = vadd.f32 0.0, %v2558
          %v2560 = vpop.f32.mrb[0].mxu0
          %v2561 = vpop.f32.mrb[0].mxu0
          %v2562 = vadd.f32 0.0, %v2561
          %v2563 = vpop.f32.mrb[0].mxu0
          %2564 = vmatprep.mubr.bf16.mxu0 0
          %2565 = vmatmul.mubr.bf16.gmra.mrb[0].mxu0 %v1962
          %v2566 = vpop.f32.mrb[0].mxu0
          %v2567 = vadd.f32 0.0, %v2566
          %v2568 = vpop.f32.mrb[0].mxu0
          %v2569 = vpop.f32.mrb[0].mxu0
          %v2570 = vadd.f32 0.0, %v2569
          %v2571 = vpop.f32.mrb[0].mxu0
          %2572 = vmatprep.mubr.bf16.mxu0 0
          %2573 = vmatmul.mubr.bf16.gmra.mrb[0].mxu0 %v1963
          %v2574 = vpop.f32.mrb[0].mxu0
          %v2575 = vadd.f32 0.0, %v2574
          %v2576 = vpop.f32.mrb[0].mxu0
          %v2577 = vpop.f32.mrb[0].mxu0
          %v2578 = vadd.f32 0.0, %v2577
          %v2579 = vpop.f32.mrb[0].mxu0
          %2580 = vmatprep.mubr.bf16.mxu0 0
          %2581 = vmatmul.mubr.bf16.gmra.mrb[0].mxu0 %v1964
          %v2582 = vpop.f32.mrb[0].mxu0
          %v2583 = vadd.f32 0.0, %v2582
          %v2584 = vpop.f32.mrb[0].mxu0
          %v2585 = vpop.f32.mrb[0].mxu0
          %v2586 = vadd.f32 0.0, %v2585
          %v2587 = vpop.f32.mrb[0].mxu0
          %2588 = vmatprep.mubr.bf16.mxu0 0
          %2589 = vmatmul.mubr.bf16.gmra.mrb[0].mxu0 %v1965
          %v2590 = vpop.f32.mrb[0].mxu0
          %v2591 = vadd.f32 0.0, %v2590
          %v2592 = vpop.f32.mrb[0].mxu0
          %v2593 = vpop.f32.mrb[0].mxu0
          %v2594 = vadd.f32 0.0, %v2593
          %v2595 = vpop.f32.mrb[0].mxu0
          %2596 = vmatprep.mubr.bf16.mxu0 0
          %2597 = vmatmul.mubr.bf16.gmra.mrb[0].mxu0 %v1966
          %v2598 = vpop.f32.mrb[0].mxu0
          %v2599 = vadd.f32 0.0, %v2598
          %v2600 = vpop.f32.mrb[0].mxu0
          %v2601 = vpop.f32.mrb[0].mxu0
          %v2602 = vadd.f32 0.0, %v2601
          %v2603 = vpop.f32.mrb[0].mxu0
          %2604 = vmatprep.mubr.bf16.mxu0 0
          %2605 = vmatmul.mubr.bf16.gmra.mrb[0].mxu0 %v1967
          %v2606 = vpop.f32.mrb[0].mxu0
          %v2607 = vadd.f32 0.0, %v2606
          %v2608 = vpop.f32.mrb[0].mxu0
          %v2609 = vpop.f32.mrb[0].mxu0
          %v2610 = vadd.f32 0.0, %v2609
          %v2611 = vpop.f32.mrb[0].mxu0
          %2612 = vmatprep.mubr.bf16.mxu0 0
          %2613 = vmatmul.mubr.bf16.gmra.mrb[0].mxu0 %v1968
          %v2614 = vpop.f32.mrb[0].mxu0
          %v2615 = vadd.f32 0.0, %v2614
          %v2616 = vpop.f32.mrb[0].mxu0
          %v2617 = vpop.f32.mrb[0].mxu0
          %v2618 = vadd.f32 0.0, %v2617
          %v2619 = vpop.f32.mrb[0].mxu0
          %2620 = vmatprep.mubr.bf16.mxu0 0
          %2621 = vmatmul.mubr.bf16.gmra.mrb[0].mxu0 %v1969
          %v2622 = vpop.f32.mrb[0].mxu0
          %v2623 = vadd.f32 0.0, %v2622
          %v2624 = vpop.f32.mrb[0].mxu0
          %v2625 = vpop.f32.mrb[0].mxu0
          %v2626 = vadd.f32 0.0, %v2625
          %v2627 = vpop.f32.mrb[0].mxu0
          %2628 = vmatprep.mubr.bf16.mxu0 0
          %2629 = vmatmul.mubr.bf16.gmra.mrb[0].mxu0 %v1970
          %v2630 = vpop.f32.mrb[0].mxu0
          %v2631 = vadd.f32 0.0, %v2630
          %v2632 = vpop.f32.mrb[0].mxu0
          %v2633 = vpop.f32.mrb[0].mxu0
          %v2634 = vadd.f32 0.0, %v2633
          %v2635 = vpop.f32.mrb[0].mxu0
          %2636 = vmatprep.mubr.bf16.mxu0 0
          %2637 = vmatmul.mubr.bf16.gmra.mrb[0].mxu0 %v1971
          %v2638 = vpop.f32.mrb[0].mxu0
          %v2639 = vadd.f32 0.0, %v2638
          %v2640 = vpop.f32.mrb[0].mxu0
          %v2641 = vpop.f32.mrb[0].mxu0
          %v2642 = vadd.f32 0.0, %v2641
          %v2643 = vpop.f32.mrb[0].mxu0
          %2644 = vdwg.mxu0
          %v2645 = vrot.slane %v2551, 2
          %v2646 = vrot.slane %v2554, 2
          %v2647 = vrot.slane %v2559, 2
          %v2648 = vrot.slane %v2562, 2
          %v2649 = vrot.slane %v2567, 2
          %v2650 = vrot.slane %v2570, 2
          %v2651 = vrot.slane %v2575, 2
          %v2652 = vrot.slane %v2578, 2
          %v2653 = vrot.slane %v2583, 2
          %v2654 = vrot.slane %v2586, 2
          %v2655 = vrot.slane %v2591, 2
          %v2656 = vrot.slane %v2594, 2
          %v2657 = vrot.slane %v2599, 2
          %v2658 = vrot.slane %v2602, 2
          %v2659 = vrot.slane %v2607, 2
          %v2660 = vrot.slane %v2610, 2
          %v2661 = vrot.slane %v2615, 2
          %v2662 = vrot.slane %v2618, 2
          %v2663 = vrot.slane %v2623, 2
          %v2664 = vrot.slane %v2626, 2
          %v2665 = vrot.slane %v2631, 2
          %v2666 = vrot.slane %v2634, 2
          %v2667 = vrot.slane %v2639, 2
          %v2668 = vrot.slane %v2642, 2
          %v2669 = vsel %vm968, %v2667, %v2668
          %v2670 = vsel %vm968, %v2666, %v2667
          %v2671 = vsel %vm968, %v2665, %v2666
          %v2672 = vsel %vm968, %v2664, %v2665
          %v2673 = vsel %vm968, %v2663, %v2664
          %v2674 = vsel %vm968, %v2662, %v2663
          %v2675 = vsel %vm968, %v2661, %v2662
          %v2676 = vsel %vm968, %v2660, %v2661
          %v2677 = vsel %vm968, %v2659, %v2660
          %v2678 = vsel %vm968, %v2658, %v2659
          %v2679 = vsel %vm968, %v2657, %v2658
          %v2680 = vsel %vm968, %v2656, %v2657
          %v2681 = vsel %vm968, %v2655, %v2656
          %v2682 = vsel %vm968, %v2654, %v2655
          %v2683 = vsel %vm968, %v2653, %v2654
          %v2684 = vsel %vm968, %v2652, %v2653
          %v2685 = vsel %vm968, %v2651, %v2652
          %v2686 = vsel %vm968, %v2650, %v2651
          %v2687 = vsel %vm968, %v2649, %v2650
          %v2688 = vsel %vm968, %v2648, %v2649
          %v2689 = vsel %vm968, %v2647, %v2648
          %v2690 = vsel %vm968, %v2646, %v2647
          %v2691 = vsel %vm968, %v2645, %v2646
          %v2692 = vsel %vm968, %v2668, %v2645
          %v2693 = vadd.f32 %v2427, %v2691
          %v2694 = vadd.f32 %v2428, %v2690
          %v2695 = vadd.f32 %v2429, %v2689
          %v2696 = vadd.f32 %v2430, %v2688
          %v2697 = vadd.f32 %v2431, %v2687
          %v2698 = vadd.f32 %v2432, %v2686
          %v2699 = vadd.f32 %v2433, %v2685
          %v2700 = vadd.f32 %v2434, %v2684
          %v2701 = vadd.f32 %v2435, %v2683
          %v2702 = vadd.f32 %v2436, %v2682
          %v2703 = vadd.f32 %v2437, %v2681
          %v2704 = vadd.f32 %v2438, %v2680
          %v2705 = vadd.f32 %v2439, %v2679
          %v2706 = vadd.f32 %v2440, %v2678
          %v2707 = vadd.f32 %v2441, %v2677
          %v2708 = vadd.f32 %v2442, %v2676
          %v2709 = vadd.f32 %v2443, %v2675
          %v2710 = vadd.f32 %v2444, %v2674
          %v2711 = vadd.f32 %v2445, %v2673
          %v2712 = vadd.f32 %v2446, %v2672
          %v2713 = vadd.f32 %v2447, %v2671
          %v2714 = vadd.f32 %v2448, %v2670
          %v2715 = vadd.f32 %v2449, %v2669
          %v2716 = vadd.f32 %v2450, %v2692
          %v2718 = vlaneseq
          %v2719 = vshrl.u32 %v2718, 7
          %v2720 = vsub.s32 0, %v2719
          %v2721 = vrot.slane %v205, %v2720
          %v2723 = vadd.f32 %v2693, %v2721
          %v2724 = vadd.f32 %v2694, %v2721
          %v2725 = vadd.f32 %v2695, %v2721
          %v2726 = vadd.f32 %v2696, %v2721
          %v2727 = vadd.f32 %v2697, %v2721
          %v2728 = vadd.f32 %v2698, %v2721
          %v2729 = vadd.f32 %v2699, %v2721
          %v2730 = vadd.f32 %v2700, %v2721
          %v2731 = vadd.f32 %v2701, %v2721
          %v2732 = vadd.f32 %v2702, %v2721
          %v2733 = vadd.f32 %v2703, %v2721
          %v2734 = vadd.f32 %v2704, %v2721
          %v2735 = vadd.f32 %v2705, %v2721
          %v2736 = vadd.f32 %v2706, %v2721
          %v2737 = vadd.f32 %v2707, %v2721
          %v2738 = vadd.f32 %v2708, %v2721
          %v2739 = vadd.f32 %v2709, %v2721
          %v2740 = vadd.f32 %v2710, %v2721
          %v2741 = vadd.f32 %v2711, %v2721
          %v2742 = vadd.f32 %v2712, %v2721
          %v2743 = vadd.f32 %v2713, %v2721
          %v2744 = vadd.f32 %v2714, %v2721
          %v2745 = vadd.f32 %v2715, %v2721
          %v2746 = vadd.f32 %v2716, %v2721
          %v2747 = vmax.f32 %v2723, 0.0
          %v2748 = vmax.f32 %v2724, 0.0
          %v2749 = vmax.f32 %v2725, 0.0
          %v2750 = vmax.f32 %v2726, 0.0
          %v2751 = vmax.f32 %v2727, 0.0
          %v2752 = vmax.f32 %v2728, 0.0
          %v2753 = vmax.f32 %v2729, 0.0
          %v2754 = vmax.f32 %v2730, 0.0
          %v2755 = vmax.f32 %v2731, 0.0
          %v2756 = vmax.f32 %v2732, 0.0
          %v2757 = vmax.f32 %v2733, 0.0
          %v2758 = vmax.f32 %v2734, 0.0
          %v2759 = vmax.f32 %v2735, 0.0
          %v2760 = vmax.f32 %v2736, 0.0
          %v2761 = vmax.f32 %v2737, 0.0
          %v2762 = vmax.f32 %v2738, 0.0
          %v2763 = vmax.f32 %v2739, 0.0
          %v2764 = vmax.f32 %v2740, 0.0
          %v2765 = vmax.f32 %v2741, 0.0
          %v2766 = vmax.f32 %v2742, 0.0
          %v2767 = vmax.f32 %v2743, 0.0
          %v2768 = vmax.f32 %v2744, 0.0
          %v2769 = vmax.f32 %v2745, 0.0
          %v2770 = vmax.f32 %v2746, 0.0
          %s2771 = smul.u32 %s212, 24
          %s2772 = scalar_lea.vmem %s203, %s2771 [#allocation7]
          %2773 = vst [vmem:[%s2772] sm:$0xff] %v2747
          %2774 = vst [vmem:[%s2772 + $0x8] sm:$0xff] %v2748
          %2775 = vst [vmem:[%s2772 + $0x10] sm:$0xff] %v2749
          %2776 = vst [vmem:[%s2772 + $0x18] sm:$0xff] %v2750
          %2777 = vst [vmem:[%s2772 + $0x20] sm:$0xff] %v2751
          %2778 = vst [vmem:[%s2772 + $0x28] sm:$0xff] %v2752
          %2779 = vst [vmem:[%s2772 + $0x30] sm:$0xff] %v2753
          %2780 = vst [vmem:[%s2772 + $0x38] sm:$0xff] %v2754
          %2781 = vst [vmem:[%s2772 + $0x40] sm:$0xff] %v2755
          %2782 = vst [vmem:[%s2772 + $0x48] sm:$0xff] %v2756
          %2783 = vst [vmem:[%s2772 + $0x50] sm:$0xff] %v2757
          %2784 = vst [vmem:[%s2772 + $0x58] sm:$0xff] %v2758
          %2785 = vst [vmem:[%s2772 + $0x60] sm:$0xff] %v2759
          %2786 = vst [vmem:[%s2772 + $0x68] sm:$0xff] %v2760
          %2787 = vst [vmem:[%s2772 + $0x70] sm:$0xff] %v2761
          %2788 = vst [vmem:[%s2772 + $0x78] sm:$0xff] %v2762
          %2789 = vst [vmem:[%s2772 + $0x80] sm:$0xff] %v2763
          %2790 = vst [vmem:[%s2772 + $0x88] sm:$0xff] %v2764
          %2791 = vst [vmem:[%s2772 + $0x90] sm:$0xff] %v2765
          %2792 = vst [vmem:[%s2772 + $0x98] sm:$0xff] %v2766
          %2793 = vst [vmem:[%s2772 + $0xa0] sm:$0xff] %v2767
          %2794 = vst [vmem:[%s2772 + $0xa8] sm:$0xff] %v2768
          %2795 = vst [vmem:[%s2772 + $0xb0] sm:$0xff] %v2769
          %2796 = vst [vmem:[%s2772 + $0xb8] sm:$0xff] %v2770
        $region45: #{tpu_custom_call.1} parent=31 // loop_footer
          %s211 = sadd.s32 1, %s207
        $region46: #{tpu_custom_call.1} parent=31 // loop_footer_branch
          %206 = sbr.rel target = $region42
        $region47: #{tpu_custom_call.1} parent=31 // loop_exit
          _
        %s2797 = sand.u32 %s97, 1
        %s2798 = scalar_lea.sflag [#allocation4], %s2797
        %s2799 = sand.u32 %s97, 1
        %s2800 = smul.addr %s2799, 384
        %s2801 = scalar_lea.vmem [#allocation7], %s2800
        // Predicated region
        $region48: #{tpu_custom_call.1} parent=31 // pred_check
          %p2802 = pneg %p107
        $region49: #{tpu_custom_call.1} parent=31 // pred_check_branch
          %2804 = sbr.rel (%p2802) target = $region51
        $region50: #{tpu_custom_call.1} parent=31 // pred_region
          %s2806 = ssub.s32 6144, 6144
          %2807 = vsyncadd %s2798, %s2806
          %s2808 = smul.addr %s21, 48
          %s2809 = smul.addr %s2808, 128
          %s2810 = scalar_lea.hbm %s3, %s2809
          %s2811 = sshll.u32 %s2801, 4
          %s2812 = int_to_ptr.vmem [resolvable:$true] %s2811
          %2817 = dma.vmem_to_hbm [thread:$0]  %s2812, 6144, %s2810, %s2798, 128, 128, 8
        $region51: #{tpu_custom_call.1} parent=31 // pred_fallthru
          _
      $region32: #{tpu_custom_call.1} parent=5 // pred_fallthru
        _
      %p2818 = scmp.le.s32.totalorder 2, %s16
      // Predicated region
      $region52: #{tpu_custom_call.1} parent=5 // pred_check
        %p2819 = pneg %p2818
      $region53: #{tpu_custom_call.1} parent=5 // pred_check_branch
        %2821 = sbr.rel (%p2819) target = $region55
      $region54: #{tpu_custom_call.1} parent=5 // pred_region
        %s2822 = ssub.s32 %s16, 2
        // Predicated region
        $region56: #{tpu_custom_call.1} parent=54 // pred_check
          %p2823 = pneg %p113
        $region57: #{tpu_custom_call.1} parent=54 // pred_check_branch
          %2825 = sbr.rel (%p2823) target = $region59
        $region58: #{tpu_custom_call.1} parent=54 // pred_region
          %s2826 = sand.u32 %s98, 1
          %s2827 = scalar_lea.sflag [#allocation4], %s2826
          %s2828 = sand.u32 %s98, 1
          %s2829 = smul.addr %s2828, 384
          %s2830 = scalar_lea.vmem [#allocation7], %s2829
          %2831 = dma.done %s2827, 6144
        $region59: #{tpu_custom_call.1} parent=54 // pred_fallthru
          _
      $region55: #{tpu_custom_call.1} parent=5 // pred_fallthru
        _
    $region6: #{tpu_custom_call.1} parent=1 // loop_footer
      %s20 = sadd.s32 1, %s16
    $region7: #{tpu_custom_call.1} parent=1 // loop_footer_branch
      %15 = sbr.rel target = $region3
    $region8: #{tpu_custom_call.1} parent=1 // loop_exit
      _
    %2832 = vsyncpa [#allocation3], 1
    %s2833 = scalar_lea.sflag [#allocation3], 1
    %2834 = vsyncpa %s2833, 1
    %2835 = vsyncpa [#allocation6], 1
    %2836 = vsyncpa [#allocation4], 1
    %s2837 = scalar_lea.sflag [#allocation4], 1
    %2838 = vsyncpa %s2837, 1

</llo_original>
